<compile_context>
chip_gen: v7x
topology: tpu7x:2x2x1
jax: 0.10.0
libtpu: 0.0.40
codegen_flags: <defaults>
</compile_context>

<pallas_src>
import functools

import numpy as np
import jax
import jax.numpy as jnp
from jax import lax
from jax.experimental import pallas as pl
from jax.experimental.pallas import tpu as pltpu


OUT_LANES = 128  # logits / packed vectors padded to a lane-dense width


def _dot(a, b):
    return jnp.dot(a, b, preferred_element_type=jnp.float32)


def _layer_norm(v, w, b, eps=1e-5):
    mu = jnp.mean(v, axis=-1, keepdims=True)
    var = jnp.mean((v - mu) ** 2, axis=-1, keepdims=True)
    return (v - mu) * lax.rsqrt(var + eps) * w + b


# --------------------------------------------------------------------------- #
# Kernel
# --------------------------------------------------------------------------- #
def hybrid_kernel(x_ref, w1_ref, w2_ref, cvec_ref, tmask_ref, pool_ref,
                  wqkv_ref, wo_ref, wff1_ref, wff2_ref, lvec_ref, wc_ref,
                  out_ref, *, n_heads, time_len):
    T = time_len
    rows, _ = x_ref.shape
    TB = rows // T
    C1 = w1_ref.shape[1]
    C2 = w2_ref.shape[1]
    D = C2
    S = pool_ref.shape[0]
    F = wff1_ref.shape[2]
    n_layers = wqkv_ref.shape[0]
    hd = D // n_heads

    cv = cvec_ref[...]                      # (8, 128) f32 slab: [t1 | t2 | cls_b]
    t1 = cv[0:1, :C1]
    t2 = cv[1:2, :C2]
    bc = cv[2:3, :]

    # Per-time-step boundary mask (0 at t==0 for the h[t-1] tap, 0 at t==T-1 for
    # the h[t+1] tap), tiled to the flat (TB*T, .) conv layout.  T % 8 == 0 keeps
    # the broadcast+reshape layout-free.
    tm = jnp.broadcast_to(tmask_ref[...][None], (TB, T, 2)).reshape(rows, 2)
    mdn = tm[:, 0:1]
    mup = tm[:, 1:2]

    def conv_bn_relu(h, w_ref, t_row):
        # k=3 "same" time-conv as ONE fused matmul (eval-BN scale folded into w):
        #   [h[t-1] | h[t] | h[t+1]] @ [tap0; tap1; tap2]  + t, then ReLU
        zrow = jnp.zeros((1, h.shape[1]), h.dtype)
        dn = jnp.concatenate([zrow, h[:-1, :]], axis=0) * mdn
        up = jnp.concatenate([h[1:, :], zrow], axis=0) * mup
        hcat = jnp.concatenate([dn, h, up], axis=-1)        # (TB*T, 3*Cin) bf16
        y = _dot(hcat, w_ref[...]) + t_row                  # f32 accumulation
        return jnp.maximum(y, 0.0).astype(jnp.bfloat16)

    h = conv_bn_relu(x_ref[...], w1_ref, t1)                # (TB*T, C1)
    h = conv_bn_relu(h, w2_ref, t2)                         # (TB*T, C2)

    # AdaptiveAvgPool2d((1, S)), batched per sample (no O(TB^2) block-diag matrix)
    h3 = h.reshape(TB, T, C2)
    pm = jnp.broadcast_to(pool_ref[...][None], (TB, S, T))
    z3 = lax.dot_general(pm, h3, (((2,), (1,)), ((0,), (0,))),
                         preferred_element_type=jnp.float32)    # (TB, S, D)
    z = z3.reshape(TB * S, D)                               # f32 residual stream

    for l in range(n_layers):                               # pre-norm encoder layers
        lv = lvec_ref[l]                                    # (8, 128) f32 per-layer slab
        ln1w, ln1b = lv[0:1, :D], lv[1:2, :D]
        bqkv, bo = lv[2:3, :3 * D], lv[3:4, :D]
        ln2w, ln2b = lv[4:5, :D], lv[5:6, :D]
        bff1, bff2 = lv[6:7, :F], lv[7:8, :D]

        # --- self-attention (per-sample batched; padded samples stay isolated) ---
        hn = _layer_norm(z, ln1w, ln1b).astype(jnp.bfloat16)
        qkv = _dot(hn, wqkv_ref[l]) + bqkv                  # (TB*S, 3D) f32, Q pre-scaled
        qkv3 = qkv.astype(jnp.bfloat16).reshape(TB, S, 3 * D)
        heads = []
        for hh in range(n_heads):
            q = qkv3[:, :, hh * hd:(hh + 1) * hd]
            k = qkv3[:, :, D + hh * hd:D + (hh + 1) * hd]
            v = qkv3[:, :, 2 * D + hh * hd:2 * D + (hh + 1) * hd]
            sc = lax.dot_general(q, k, (((2,), (2,)), ((0,), (0,))),
                                 preferred_element_type=jnp.float32)   # (TB, S, S) f32
            sc = sc - jnp.max(sc, axis=-1, keepdims=True)
            p = jnp.exp(sc)
            # approx reciprocal (EUP): ~1e-3 rel. error vs exact divide, accepted.
            p = p * pl.reciprocal(jnp.sum(p, axis=-1, keepdims=True), approx=True)
            heads.append(lax.dot_general(p.astype(jnp.bfloat16), v,
                                         (((2,), (1,)), ((0,), (0,))),
                                         preferred_element_type=jnp.float32))
        o = jnp.concatenate(heads, axis=-1).reshape(TB * S, D)         # f32
        z = z + _dot(o.astype(jnp.bfloat16), wo_ref[l]) + bo

        # --- feed-forward block ---
        hn = _layer_norm(z, ln2w, ln2b).astype(jnp.bfloat16)
        ff = jnp.maximum(_dot(hn, wff1_ref[l]) + bff1, 0.0)
        z = z + _dot(ff.astype(jnp.bfloat16), wff2_ref[l]) + bff2

    # per-sample sequence mean + lane-dense (padded-to-128) classifier
    pooled = jnp.mean(z.reshape(TB, S, D), axis=1)          # (TB, D) f32
    out_ref[...] = _dot(pooled.astype(jnp.bfloat16), wc_ref[...]) + bc


PARAM_ORDER = ("w1", "w2", "cvec", "tmask", "pool",
               "wqkv", "wo", "wff1", "wff2", "lvec", "wc")


# --------------------------------------------------------------------------- #
# Parameter construction (raw torch-layout params, packed kernel params)
# --------------------------------------------------------------------------- #
def adaptive_pool_matrix(S, T):
    m = np.zeros((S, T), np.float32)
    for j in range(S):
        a = (j * T) // S
        b = -((-(j + 1) * T) // S)          # ceil((j+1)*T/S)
        m[j, a:b] = 1.0 / (b - a)
    return jnp.asarray(m)


def init_raw_params(key, *, n_channels, n_start_chans, n_layers, ff_dim, n_classes):
    C1 = n_start_chans
    C2 = 2 * n_start_chans
    D = C2
    F = ff_dim
    ks = iter(jax.random.split(key, 64))

    def rnd(shape, s=0.2):
        return s * jax.random.normal(next(ks), shape, jnp.float32)

    raw = dict(
        conv1_w=rnd((C1, 1, n_channels, 3)), conv1_b=rnd((C1,), 0.1),
        bn1_gamma=1.0 + rnd((C1,), 0.1), bn1_beta=rnd((C1,), 0.1),
        bn1_mean=rnd((C1,), 0.1),
        bn1_var=1.0 + 0.1 * jnp.abs(jax.random.normal(next(ks), (C1,), jnp.float32)),
        conv2_w=rnd((C2, C1, 1, 3)), conv2_b=rnd((C2,), 0.1),
        bn2_gamma=1.0 + rnd((C2,), 0.1), bn2_beta=rnd((C2,), 0.1),
        bn2_mean=rnd((C2,), 0.1),
        bn2_var=1.0 + 0.1 * jnp.abs(jax.random.normal(next(ks), (C2,), jnp.float32)),
        layers=[dict(ln1_w=1.0 + rnd((D,), 0.1), ln1_b=rnd((D,), 0.1),
                     in_proj_w=rnd((3 * D, D)), in_proj_b=rnd((3 * D,), 0.1),
                     out_proj_w=rnd((D, D)), out_proj_b=rnd((D,), 0.1),
                     ln2_w=1.0 + rnd((D,), 0.1), ln2_b=rnd((D,), 0.1),
                     lin1_w=rnd((F, D)), lin1_b=rnd((F,), 0.1),
                     lin2_w=rnd((D, F)), lin2_b=rnd((D,), 0.1))
                for _ in range(n_layers)],
        cls_w=rnd((n_classes, D)), cls_b=rnd((n_classes,), 0.1),
    )
    return raw


def pack_params(raw, *, hidden_dim, input_time_length, n_heads, n_classes,
                out_lanes=OUT_LANES):
    eps = 1e-5
    T, S = input_time_length, hidden_dim
    C1 = raw["conv1_w"].shape[0]
    Ch = raw["conv1_w"].shape[2]
    C2 = raw["conv2_w"].shape[0]
    D = C2
    L = len(raw["layers"])
    F = raw["layers"][0]["lin1_w"].shape[0]
    hd = D // n_heads
    assert n_heads * hd == D
    # layout-free in-kernel reshapes require sublane-aligned T and S
    assert T % 8 == 0 and S % 8 == 0
    assert 3 * D <= out_lanes and F <= out_lanes
    assert C1 <= out_lanes and C2 <= out_lanes and n_classes <= out_lanes

    np_ = lambda a: np.asarray(a, np.float32)

    # eval-mode BatchNorm folded into the fused conv taps: y = hcat @ (W*s) + t
    s1 = np_(raw["bn1_gamma"]) / np.sqrt(np_(raw["bn1_var"]) + eps)
    w1 = np_(raw["conv1_w"])[:, 0].transpose(2, 1, 0).reshape(3 * Ch, C1) * s1[None, :]
    t1 = (np_(raw["conv1_b"]) - np_(raw["bn1_mean"])) * s1 + np_(raw["bn1_beta"])
    s2 = np_(raw["bn2_gamma"]) / np.sqrt(np_(raw["bn2_var"]) + eps)
    w2 = np_(raw["conv2_w"])[:, :, 0].transpose(2, 1, 0).reshape(3 * C1, C2) * s2[None, :]
    t2 = (np_(raw["conv2_b"]) - np_(raw["bn2_mean"])) * s2 + np_(raw["bn2_beta"])

    # conv-bias / classifier-bias slab: rows [t1 | t2 | cls_b], f32, 128 lanes
    cvec = np.zeros((8, out_lanes), np.float32)
    cvec[0, :C1] = t1
    cvec[1, :C2] = t2
    cvec[2, :n_classes] = np_(raw["cls_b"])

    # time-boundary mask for the fused k=3 conv: col0 -> (t != 0), col1 -> (t != T-1)
    tmask = np.ones((T, 2), np.float32)
    tmask[0, 0] = 0.0
    tmask[T - 1, 1] = 0.0

    pool = np.asarray(adaptive_pool_matrix(S, T), np.float32)       # (S, T)

    # transformer layer stacks; linear weights pre-transposed (x @ W.T form);
    # 1/sqrt(hd) attention scale folded into the Q projection weight and bias.
    scale = 1.0 / float(hd) ** 0.5
    wqkv = np.stack([np_(l["in_proj_w"]).T for l in raw["layers"]])   # (L, D, 3D)
    wqkv[:, :, :D] *= scale
    wo = np.stack([np_(l["out_proj_w"]).T for l in raw["layers"]])    # (L, D, D)
    wff1 = np.stack([np_(l["lin1_w"]).T for l in raw["layers"]])      # (L, D, F)
    wff2 = np.stack([np_(l["lin2_w"]).T for l in raw["layers"]])      # (L, F, D)

    # one lane-dense slab holding every per-layer vector (rows are fixed slots)
    lvec = np.zeros((L, 8, out_lanes), np.float32)
    for i, l in enumerate(raw["layers"]):
        bqkv = np_(l["in_proj_b"]).copy()
        bqkv[:D] *= scale
        lvec[i, 0, :D] = np_(l["ln1_w"]);  lvec[i, 1, :D] = np_(l["ln1_b"])
        lvec[i, 2, :3 * D] = bqkv;         lvec[i, 3, :D] = np_(l["out_proj_b"])
        lvec[i, 4, :D] = np_(l["ln2_w"]);  lvec[i, 5, :D] = np_(l["ln2_b"])
        lvec[i, 6, :F] = np_(l["lin1_b"]); lvec[i, 7, :D] = np_(l["lin2_b"])

    wc = np.zeros((D, out_lanes), np.float32)
    wc[:, :n_classes] = np_(raw["cls_w"]).T

    bf16 = lambda a: jnp.asarray(a, jnp.bfloat16)
    f32 = lambda a: jnp.asarray(a, jnp.float32)
    return dict(w1=bf16(w1), w2=bf16(w2), cvec=f32(cvec), tmask=bf16(tmask),
                pool=bf16(pool), wqkv=bf16(wqkv), wo=bf16(wo),
                wff1=bf16(wff1), wff2=bf16(wff2), lvec=f32(lvec), wc=bf16(wc))


# --------------------------------------------------------------------------- #
# Pure-JAX reference (mirror of the PyTorch module's eval-mode forward, f32)
# --------------------------------------------------------------------------- #
def reference_forward(x, raw, *, n_heads, hidden_dim):
    eps = 1e-5

    def conv_time3(h, w):            # h: (B, Cin, T), w: (Cout, Cin, 3), zero "same" pad
        T = h.shape[-1]
        hp = jnp.pad(h, ((0, 0), (0, 0), (1, 1)))
        return (jnp.einsum("oi,bit->bot", w[:, :, 0], hp[:, :, 0:T])
                + jnp.einsum("oi,bit->bot", w[:, :, 1], hp[:, :, 1:T + 1])
                + jnp.einsum("oi,bit->bot", w[:, :, 2], hp[:, :, 2:T + 2]))

    def bn_eval(h, g, b, m, v):
        return (h - m[None, :, None]) * (g / jnp.sqrt(v + eps))[None, :, None] + b[None, :, None]

    def ln(v, w, b):
        mu = v.mean(-1, keepdims=True)
        var = ((v - mu) ** 2).mean(-1, keepdims=True)
        return (v - mu) / jnp.sqrt(var + eps) * w + b

    h = conv_time3(x, raw["conv1_w"][:, 0]) + raw["conv1_b"][None, :, None]
    h = jax.nn.relu(bn_eval(h, raw["bn1_gamma"], raw["bn1_beta"], raw["bn1_mean"], raw["bn1_var"]))
    h = conv_time3(h, raw["conv2_w"][:, :, 0]) + raw["conv2_b"][None, :, None]
    h = jax.nn.relu(bn_eval(h, raw["bn2_gamma"], raw["bn2_beta"], raw["bn2_mean"], raw["bn2_var"]))

    pool_m = adaptive_pool_matrix(hidden_dim, h.shape[-1])          # (S, T)
    z = jnp.einsum("st,bct->bsc", pool_m, h)                        # (B, S, D)

    Bz, S, D = z.shape
    hd = D // n_heads
    for lyr in raw["layers"]:
        hn = ln(z, lyr["ln1_w"], lyr["ln1_b"])
        qkv = hn @ lyr["in_proj_w"].T + lyr["in_proj_b"]
        q, k, v = jnp.split(qkv, 3, axis=-1)

        def heads(a):
            return a.reshape(Bz, S, n_heads, hd).transpose(0, 2, 1, 3)
        qh, kh, vh = heads(q), heads(k), heads(v)
        sc = jnp.einsum("bhqd,bhkd->bhqk", qh, kh) * (1.0 / float(hd) ** 0.5)
        p = jax.nn.softmax(sc, axis=-1)
        o = jnp.einsum("bhqk,bhkd->bhqd", p, vh).transpose(0, 2, 1, 3).reshape(Bz, S, D)
        z = z + o @ lyr["out_proj_w"].T + lyr["out_proj_b"]
        hn = ln(z, lyr["ln2_w"], lyr["ln2_b"])
        ff = jax.nn.relu(hn @ lyr["lin1_w"].T + lyr["lin1_b"]) @ lyr["lin2_w"].T + lyr["lin2_b"]
        z = z + ff
    pooled = z.mean(axis=1)
    return pooled @ raw["cls_w"].T + raw["cls_b"]


# --------------------------------------------------------------------------- #
# Wrapper
# --------------------------------------------------------------------------- #
def hybrid_cnn_transformer(x, packed, *, n_heads, n_classes, block_batch=32):
    B, Ch, T = x.shape
    assert T % 8 == 0
    TB = int(block_batch)
    if B < 2 * TB:
        # ensure the "parallel" grid axis has >= 2 steps whenever the batch allows
        # it, so both of v7x's TensorCores get work (no effect on v5e/v6e).
        TB = max(1, (B + 1) // 2)
    grid_n = (B + TB - 1) // TB
    B_pad = grid_n * TB

    x = jnp.pad(x.astype(jnp.float32), ((0, B_pad - B), (0, 0), (0, 0)))
    # time-major flat layout per grid block: row b*T + t holds x[b, :, t]
    x3 = jnp.transpose(x, (0, 2, 1)).reshape(grid_n, TB * T, Ch).astype(jnp.bfloat16)

    weights = [packed[k] for k in PARAM_ORDER]
    out_lanes = packed["wc"].shape[-1]

    def full_spec(a):
        nd = a.ndim
        return pl.BlockSpec(a.shape, lambda b, _nd=nd: (0,) * _nd)

    in_specs = [pl.BlockSpec((None, TB * T, Ch), lambda b: (b, 0, 0))]
    in_specs += [full_spec(a) for a in weights]
    out_spec = pl.BlockSpec((None, TB, out_lanes), lambda b: (b, 0, 0))

    out = pl.pallas_call(
        functools.partial(hybrid_kernel, n_heads=n_heads, time_len=T),
        out_shape=jax.ShapeDtypeStruct((grid_n, TB, out_lanes), jnp.float32),
        grid=(grid_n,),
        in_specs=in_specs,
        out_specs=out_spec,
        compiler_params=pltpu.CompilerParams(
            dimension_semantics=("parallel",),
            vmem_limit_bytes=32 * 1024 * 1024),
    )(x3, *weights)
    return out.reshape(B_pad, out_lanes)[:B, :n_classes]


if __name__ == "__main__":
    # Module hyper-parameters (small, consistent with the forward pass)
    B = 2
    n_channels = 4
    n_start_chans = 4            # -> d_model = 8
    n_layers_transformer = 2
    n_heads = 2
    hidden_dim = 8               # transformer sequence length after pooling
    ff_dim = 16
    input_time_length = 16
    n_classes = 2
    # dropout = 0.0 (inference-mode identity)

    key = jax.random.PRNGKey(0)
    pkey, xkey = jax.random.split(key)
    raw = init_raw_params(pkey,
                          n_channels=n_channels,
                          n_start_chans=n_start_chans,
                          n_layers=n_layers_transformer,
                          ff_dim=ff_dim,
                          n_classes=n_classes)
    packed = pack_params(raw,
                         hidden_dim=hidden_dim,
                         input_time_length=input_time_length,
                         n_heads=n_heads,
                         n_classes=n_classes)

    x = jax.random.normal(xkey, (B, n_channels, input_time_length), jnp.float32)

    logits = hybrid_cnn_transformer(x, packed,
                                    n_heads=n_heads,
                                    n_classes=n_classes,
                                    block_batch=32)
    logits = jax.block_until_ready(logits)

    ref = reference_forward(x, raw, n_heads=n_heads, hidden_dim=hidden_dim)
    assert logits.shape == (B, n_classes)
    assert bool(jnp.all(jnp.isfinite(logits)))
    # bf16 matmul operands (with f32 accumulation) + approx reciprocal are a
    # deliberate precision/perf trade-off vs the f32 reference -> 5e-2 tolerance.
    np.testing.assert_allclose(np.asarray(logits), np.asarray(ref), rtol=5e-2, atol=5e-2)
    print("KERNEL_OK")
</pallas_src>

<mosaic_0001>
module attributes {stable_mosaic.version = 11 : i64} {
  func.func @hybrid_kernel(%arg0: i32, %arg1: memref<1x16x4xbf16, #tpu.memory_space<vmem>>, %arg2: memref<12x4xbf16, #tpu.memory_space<vmem>>, %arg3: memref<12x8xbf16, #tpu.memory_space<vmem>>, %arg4: memref<8x128xf32, #tpu.memory_space<vmem>>, %arg5: memref<16x2xbf16, #tpu.memory_space<vmem>>, %arg6: memref<8x16xbf16, #tpu.memory_space<vmem>>, %arg7: memref<2x8x24xbf16, #tpu.memory_space<vmem>>, %arg8: memref<2x8x8xbf16, #tpu.memory_space<vmem>>, %arg9: memref<2x8x16xbf16, #tpu.memory_space<vmem>>, %arg10: memref<2x16x8xbf16, #tpu.memory_space<vmem>>, %arg11: memref<2x8x128xf32, #tpu.memory_space<vmem>>, %arg12: memref<8x128xbf16, #tpu.memory_space<vmem>>, %arg13: memref<1x1x128xf32, #tpu.memory_space<vmem>>) attributes {dimension_semantics = [#tpu.dimension_semantics<parallel>], iteration_bounds = array<i64: 2>, scalar_prefetch = 0 : i64, scratch_operands = 0 : i64, tpu.core_type = #tpu.core_type<tc>, window_params = [{transform_indices = @transform_0, window_bounds = array<i64: 1, 16, 4>}, {pipeline_mode = #tpu.pipeline_mode<synchronous>, transform_indices = @transform_1, window_bounds = array<i64: 12, 4>}, {pipeline_mode = #tpu.pipeline_mode<synchronous>, transform_indices = @transform_2, window_bounds = array<i64: 12, 8>}, {pipeline_mode = #tpu.pipeline_mode<synchronous>, transform_indices = @transform_3, window_bounds = array<i64: 8, 128>}, {pipeline_mode = #tpu.pipeline_mode<synchronous>, transform_indices = @transform_4, window_bounds = array<i64: 16, 2>}, {pipeline_mode = #tpu.pipeline_mode<synchronous>, transform_indices = @transform_5, window_bounds = array<i64: 8, 16>}, {pipeline_mode = #tpu.pipeline_mode<synchronous>, transform_indices = @transform_6, window_bounds = array<i64: 2, 8, 24>}, {pipeline_mode = #tpu.pipeline_mode<synchronous>, transform_indices = @transform_7, window_bounds = array<i64: 2, 8, 8>}, {pipeline_mode = #tpu.pipeline_mode<synchronous>, transform_indices = @transform_8, window_bounds = array<i64: 2, 8, 16>}, {pipeline_mode = #tpu.pipeline_mode<synchronous>, transform_indices = @transform_9, window_bounds = array<i64: 2, 16, 8>}, {pipeline_mode = #tpu.pipeline_mode<synchronous>, transform_indices = @transform_10, window_bounds = array<i64: 2, 8, 128>}, {pipeline_mode = #tpu.pipeline_mode<synchronous>, transform_indices = @transform_11, window_bounds = array<i64: 8, 128>}, {transform_indices = @transform_12, window_bounds = array<i64: 1, 1, 128>}]} {
    %c0 = arith.constant 0 : index
    %c0_0 = arith.constant 0 : index
    %0 = vector.load %arg4[%c0, %c0_0] : memref<8x128xf32, #tpu.memory_space<vmem>>, vector<8x128xf32>
    %1 = vector.extract_strided_slice %0 {offsets = [0, 0], sizes = [1, 4], strides = [1, 1]} : vector<8x128xf32> to vector<1x4xf32>
    %2 = vector.extract_strided_slice %0 {offsets = [1, 0], sizes = [1, 8], strides = [1, 1]} : vector<8x128xf32> to vector<1x8xf32>
    %3 = vector.extract_strided_slice %0 {offsets = [2, 0], sizes = [1, 128], strides = [1, 1]} : vector<8x128xf32> to vector<1x128xf32>
    %c0_1 = arith.constant 0 : index
    %c0_2 = arith.constant 0 : index
    %4 = vector.load %arg5[%c0_1, %c0_2] : memref<16x2xbf16, #tpu.memory_space<vmem>>, vector<16x2xbf16>
    %5 = vector.shape_cast %4 : vector<16x2xbf16> to vector<1x16x2xbf16>
    %6 = vector.shape_cast %5 : vector<1x16x2xbf16> to vector<16x2xbf16>
    %7 = vector.extract_strided_slice %6 {offsets = [0, 0], sizes = [16, 1], strides = [1, 1]} : vector<16x2xbf16> to vector<16x1xbf16>
    %8 = vector.extract_strided_slice %6 {offsets = [0, 1], sizes = [16, 1], strides = [1, 1]} : vector<16x2xbf16> to vector<16x1xbf16>
    %c0_3 = arith.constant 0 : index
    %c0_4 = arith.constant 0 : index
    %c0_5 = arith.constant 0 : index
    %9 = vector.load %arg1[%c0_3, %c0_4, %c0_5] : memref<1x16x4xbf16, #tpu.memory_space<vmem>>, vector<1x16x4xbf16>
    %10 = vector.shape_cast %9 : vector<1x16x4xbf16> to vector<16x4xbf16>
    %cst = arith.constant 0.000000e+00 : bf16
    %11 = vector.broadcast %cst : bf16 to vector<1x4xbf16>
    %12 = vector.extract_strided_slice %10 {offsets = [0, 0], sizes = [15, 4], strides = [1, 1]} : vector<16x4xbf16> to vector<15x4xbf16>
    %13 = tpu.concatenate %11, %12 in 0 : vector<1x4xbf16>, vector<15x4xbf16> -> vector<16x4xbf16>
    %14 = vector.broadcast %7 : vector<16x1xbf16> to vector<16x4xbf16>
    %15 = arith.mulf %13, %14 : vector<16x4xbf16>
    %16 = vector.extract_strided_slice %10 {offsets = [1, 0], sizes = [15, 4], strides = [1, 1]} : vector<16x4xbf16> to vector<15x4xbf16>
    %17 = tpu.concatenate %16, %11 in 0 : vector<15x4xbf16>, vector<1x4xbf16> -> vector<16x4xbf16>
    %18 = vector.broadcast %8 : vector<16x1xbf16> to vector<16x4xbf16>
    %19 = arith.mulf %17, %18 : vector<16x4xbf16>
    %20 = tpu.concatenate %15, %10, %19 in 1 : vector<16x4xbf16>, vector<16x4xbf16>, vector<16x4xbf16> -> vector<16x12xbf16>
    %c0_6 = arith.constant 0 : index
    %c0_7 = arith.constant 0 : index
    %21 = vector.load %arg2[%c0_6, %c0_7] : memref<12x4xbf16, #tpu.memory_space<vmem>>, vector<12x4xbf16>
    %cst_8 = arith.constant dense<0.000000e+00> : vector<16x4xf32>
    %22 = tpu.matmul %20, %21, %cst_8 {dimension_numbers = #tpu.dot_dimension_numbers<[1], [0], [0], [1], [0, 0, 1, 1], [], []>} : vector<16x12xbf16>, vector<12x4xbf16>, vector<16x4xf32> -> vector<16x4xf32>
    %23 = vector.broadcast %1 : vector<1x4xf32> to vector<16x4xf32>
    %24 = arith.addf %22, %23 : vector<16x4xf32>
    %cst_9 = arith.constant 0.000000e+00 : f32
    %25 = vector.broadcast %cst_9 : f32 to vector<16x4xf32>
    %26 = arith.maximumf %24, %25 : vector<16x4xf32>
    %27 = arith.truncf %26 : vector<16x4xf32> to vector<16x4xbf16>
    %cst_10 = arith.constant 0.000000e+00 : bf16
    %28 = vector.broadcast %cst_10 : bf16 to vector<1x4xbf16>
    %29 = vector.extract_strided_slice %27 {offsets = [0, 0], sizes = [15, 4], strides = [1, 1]} : vector<16x4xbf16> to vector<15x4xbf16>
    %30 = tpu.concatenate %28, %29 in 0 : vector<1x4xbf16>, vector<15x4xbf16> -> vector<16x4xbf16>
    %31 = vector.broadcast %7 : vector<16x1xbf16> to vector<16x4xbf16>
    %32 = arith.mulf %30, %31 : vector<16x4xbf16>
    %33 = vector.extract_strided_slice %27 {offsets = [1, 0], sizes = [15, 4], strides = [1, 1]} : vector<16x4xbf16> to vector<15x4xbf16>
    %34 = tpu.concatenate %33, %28 in 0 : vector<15x4xbf16>, vector<1x4xbf16> -> vector<16x4xbf16>
    %35 = vector.broadcast %8 : vector<16x1xbf16> to vector<16x4xbf16>
    %36 = arith.mulf %34, %35 : vector<16x4xbf16>
    %37 = tpu.concatenate %32, %27, %36 in 1 : vector<16x4xbf16>, vector<16x4xbf16>, vector<16x4xbf16> -> vector<16x12xbf16>
    %c0_11 = arith.constant 0 : index
    %c0_12 = arith.constant 0 : index
    %38 = vector.load %arg3[%c0_11, %c0_12] : memref<12x8xbf16, #tpu.memory_space<vmem>>, vector<12x8xbf16>
    %cst_13 = arith.constant dense<0.000000e+00> : vector<16x8xf32>
    %39 = tpu.matmul %37, %38, %cst_13 {dimension_numbers = #tpu.dot_dimension_numbers<[1], [0], [0], [1], [0, 0, 1, 1], [], []>} : vector<16x12xbf16>, vector<12x8xbf16>, vector<16x8xf32> -> vector<16x8xf32>
    %40 = vector.broadcast %2 : vector<1x8xf32> to vector<16x8xf32>
    %41 = arith.addf %39, %40 : vector<16x8xf32>
    %cst_14 = arith.constant 0.000000e+00 : f32
    %42 = vector.broadcast %cst_14 : f32 to vector<16x8xf32>
    %43 = arith.maximumf %41, %42 : vector<16x8xf32>
    %44 = arith.truncf %43 : vector<16x8xf32> to vector<16x8xbf16>
    %45 = vector.shape_cast %44 : vector<16x8xbf16> to vector<1x16x8xbf16>
    %c0_15 = arith.constant 0 : index
    %c0_16 = arith.constant 0 : index
    %46 = vector.load %arg6[%c0_15, %c0_16] : memref<8x16xbf16, #tpu.memory_space<vmem>>, vector<8x16xbf16>
    %47 = vector.shape_cast %46 : vector<8x16xbf16> to vector<1x8x16xbf16>
    %cst_17 = arith.constant dense<0.000000e+00> : vector<1x8x8xf32>
    %48 = tpu.matmul %47, %45, %cst_17 {dimension_numbers = #tpu.dot_dimension_numbers<[2], [1], [1], [2], [0, 0, 0, 1, 1, 2], [0], [0]>} : vector<1x8x16xbf16>, vector<1x16x8xbf16>, vector<1x8x8xf32> -> vector<1x8x8xf32>
    %49 = vector.shape_cast %48 : vector<1x8x8xf32> to vector<8x8xf32>
    %c0_18 = arith.constant 0 : index
    %c0_19 = arith.constant 0 : index
    %c0_20 = arith.constant 0 : index
    %50 = vector.load %arg11[%c0_18, %c0_19, %c0_20] : memref<2x8x128xf32, #tpu.memory_space<vmem>>, vector<1x8x128xf32>
    %51 = vector.shape_cast %50 : vector<1x8x128xf32> to vector<8x128xf32>
    %52 = vector.extract_strided_slice %51 {offsets = [0, 0], sizes = [1, 8], strides = [1, 1]} : vector<8x128xf32> to vector<1x8xf32>
    %53 = vector.extract_strided_slice %51 {offsets = [1, 0], sizes = [1, 8], strides = [1, 1]} : vector<8x128xf32> to vector<1x8xf32>
    %54 = vector.extract_strided_slice %51 {offsets = [2, 0], sizes = [1, 24], strides = [1, 1]} : vector<8x128xf32> to vector<1x24xf32>
    %55 = vector.extract_strided_slice %51 {offsets = [3, 0], sizes = [1, 8], strides = [1, 1]} : vector<8x128xf32> to vector<1x8xf32>
    %56 = vector.extract_strided_slice %51 {offsets = [4, 0], sizes = [1, 8], strides = [1, 1]} : vector<8x128xf32> to vector<1x8xf32>
    %57 = vector.extract_strided_slice %51 {offsets = [5, 0], sizes = [1, 8], strides = [1, 1]} : vector<8x128xf32> to vector<1x8xf32>
    %58 = vector.extract_strided_slice %51 {offsets = [6, 0], sizes = [1, 16], strides = [1, 1]} : vector<8x128xf32> to vector<1x16xf32>
    %59 = vector.extract_strided_slice %51 {offsets = [7, 0], sizes = [1, 8], strides = [1, 1]} : vector<8x128xf32> to vector<1x8xf32>
    %cst_21 = arith.constant dense<0.000000e+00> : vector<8xf32>
    %60 = vector.multi_reduction <add>, %49, %cst_21 [1] : vector<8x8xf32> to vector<8xf32>
    %61 = vector.shape_cast %60 : vector<8xf32> to vector<8x1xf32>
    %cst_22 = arith.constant 8.000000e+00 : f32
    %62 = vector.broadcast %cst_22 : f32 to vector<8x1xf32>
    %63 = arith.divf %61, %62 : vector<8x1xf32>
    %64 = vector.broadcast %63 : vector<8x1xf32> to vector<8x8xf32>
    %65 = arith.subf %49, %64 : vector<8x8xf32>
    %66 = arith.mulf %65, %65 : vector<8x8xf32>
    %cst_23 = arith.constant dense<0.000000e+00> : vector<8xf32>
    %67 = vector.multi_reduction <add>, %66, %cst_23 [1] : vector<8x8xf32> to vector<8xf32>
    %68 = vector.shape_cast %67 : vector<8xf32> to vector<8x1xf32>
    %cst_24 = arith.constant 8.000000e+00 : f32
    %69 = vector.broadcast %cst_24 : f32 to vector<8x1xf32>
    %70 = arith.divf %68, %69 : vector<8x1xf32>
    %71 = vector.broadcast %63 : vector<8x1xf32> to vector<8x8xf32>
    %72 = arith.subf %49, %71 : vector<8x8xf32>
    %cst_25 = arith.constant 9.99999974E-6 : f32
    %73 = vector.broadcast %cst_25 : f32 to vector<8x1xf32>
    %74 = arith.addf %70, %73 : vector<8x1xf32>
    %75 = math.rsqrt %74 : vector<8x1xf32>
    %76 = vector.broadcast %75 : vector<8x1xf32> to vector<8x8xf32>
    %77 = arith.mulf %72, %76 : vector<8x8xf32>
    %78 = vector.broadcast %52 : vector<1x8xf32> to vector<8x8xf32>
    %79 = arith.mulf %77, %78 : vector<8x8xf32>
    %80 = vector.broadcast %53 : vector<1x8xf32> to vector<8x8xf32>
    %81 = arith.addf %79, %80 : vector<8x8xf32>
    %82 = arith.truncf %81 : vector<8x8xf32> to vector<8x8xbf16>
    %c0_26 = arith.constant 0 : index
    %c0_27 = arith.constant 0 : index
    %c0_28 = arith.constant 0 : index
    %83 = vector.load %arg7[%c0_26, %c0_27, %c0_28] : memref<2x8x24xbf16, #tpu.memory_space<vmem>>, vector<1x8x24xbf16>
    %84 = vector.shape_cast %83 : vector<1x8x24xbf16> to vector<8x24xbf16>
    %cst_29 = arith.constant dense<0.000000e+00> : vector<8x24xf32>
    %85 = tpu.matmul %82, %84, %cst_29 {dimension_numbers = #tpu.dot_dimension_numbers<[1], [0], [0], [1], [0, 0, 1, 1], [], []>} : vector<8x8xbf16>, vector<8x24xbf16>, vector<8x24xf32> -> vector<8x24xf32>
    %86 = vector.broadcast %54 : vector<1x24xf32> to vector<8x24xf32>
    %87 = arith.addf %85, %86 : vector<8x24xf32>
    %88 = arith.truncf %87 : vector<8x24xf32> to vector<8x24xbf16>
    %89 = vector.shape_cast %88 : vector<8x24xbf16> to vector<1x8x24xbf16>
    %90 = vector.extract_strided_slice %89 {offsets = [0, 0, 0], sizes = [1, 8, 4], strides = [1, 1, 1]} : vector<1x8x24xbf16> to vector<1x8x4xbf16>
    %91 = vector.extract_strided_slice %89 {offsets = [0, 0, 8], sizes = [1, 8, 4], strides = [1, 1, 1]} : vector<1x8x24xbf16> to vector<1x8x4xbf16>
    %92 = vector.extract_strided_slice %89 {offsets = [0, 0, 16], sizes = [1, 8, 4], strides = [1, 1, 1]} : vector<1x8x24xbf16> to vector<1x8x4xbf16>
    %cst_30 = arith.constant dense<0.000000e+00> : vector<1x8x8xf32>
    %93 = tpu.matmul %90, %91, %cst_30 {dimension_numbers = #tpu.dot_dimension_numbers<[2], [2], [1], [1], [0, 0, 0, 1, 1, 1], [0], [0]>} : vector<1x8x4xbf16>, vector<1x8x4xbf16>, vector<1x8x8xf32> -> vector<1x8x8xf32>
    %cst_31 = arith.constant dense<0xFF800000> : vector<1x8xf32>
    %94 = vector.multi_reduction <maximumf>, %93, %cst_31 [2] : vector<1x8x8xf32> to vector<1x8xf32>
    %95 = vector.shape_cast %94 : vector<1x8xf32> to vector<1x8x1xf32>
    %96 = vector.broadcast %95 : vector<1x8x1xf32> to vector<1x8x8xf32>
    %97 = arith.subf %93, %96 : vector<1x8x8xf32>
    %98 = math.exp %97 : vector<1x8x8xf32>
    %cst_32 = arith.constant dense<0.000000e+00> : vector<1x8xf32>
    %99 = vector.multi_reduction <add>, %98, %cst_32 [2] : vector<1x8x8xf32> to vector<1x8xf32>
    %100 = vector.shape_cast %99 : vector<1x8xf32> to vector<1x8x1xf32>
    %101 = tpu.reciprocal %100 {approx = true} : vector<1x8x1xf32> -> vector<1x8x1xf32>
    %102 = vector.broadcast %101 : vector<1x8x1xf32> to vector<1x8x8xf32>
    %103 = arith.mulf %98, %102 : vector<1x8x8xf32>
    %104 = arith.truncf %103 : vector<1x8x8xf32> to vector<1x8x8xbf16>
    %cst_33 = arith.constant dense<0.000000e+00> : vector<1x8x4xf32>
    %105 = tpu.matmul %104, %92, %cst_33 {dimension_numbers = #tpu.dot_dimension_numbers<[2], [1], [1], [2], [0, 0, 0, 1, 1, 2], [0], [0]>} : vector<1x8x8xbf16>, vector<1x8x4xbf16>, vector<1x8x4xf32> -> vector<1x8x4xf32>
    %106 = vector.extract_strided_slice %89 {offsets = [0, 0, 4], sizes = [1, 8, 4], strides = [1, 1, 1]} : vector<1x8x24xbf16> to vector<1x8x4xbf16>
    %107 = vector.extract_strided_slice %89 {offsets = [0, 0, 12], sizes = [1, 8, 4], strides = [1, 1, 1]} : vector<1x8x24xbf16> to vector<1x8x4xbf16>
    %108 = vector.extract_strided_slice %89 {offsets = [0, 0, 20], sizes = [1, 8, 4], strides = [1, 1, 1]} : vector<1x8x24xbf16> to vector<1x8x4xbf16>
    %cst_34 = arith.constant dense<0.000000e+00> : vector<1x8x8xf32>
    %109 = tpu.matmul %106, %107, %cst_34 {dimension_numbers = #tpu.dot_dimension_numbers<[2], [2], [1], [1], [0, 0, 0, 1, 1, 1], [0], [0]>} : vector<1x8x4xbf16>, vector<1x8x4xbf16>, vector<1x8x8xf32> -> vector<1x8x8xf32>
    %cst_35 = arith.constant dense<0xFF800000> : vector<1x8xf32>
    %110 = vector.multi_reduction <maximumf>, %109, %cst_35 [2] : vector<1x8x8xf32> to vector<1x8xf32>
    %111 = vector.shape_cast %110 : vector<1x8xf32> to vector<1x8x1xf32>
    %112 = vector.broadcast %111 : vector<1x8x1xf32> to vector<1x8x8xf32>
    %113 = arith.subf %109, %112 : vector<1x8x8xf32>
    %114 = math.exp %113 : vector<1x8x8xf32>
    %cst_36 = arith.constant dense<0.000000e+00> : vector<1x8xf32>
    %115 = vector.multi_reduction <add>, %114, %cst_36 [2] : vector<1x8x8xf32> to vector<1x8xf32>
    %116 = vector.shape_cast %115 : vector<1x8xf32> to vector<1x8x1xf32>
    %117 = tpu.reciprocal %116 {approx = true} : vector<1x8x1xf32> -> vector<1x8x1xf32>
    %118 = vector.broadcast %117 : vector<1x8x1xf32> to vector<1x8x8xf32>
    %119 = arith.mulf %114, %118 : vector<1x8x8xf32>
    %120 = arith.truncf %119 : vector<1x8x8xf32> to vector<1x8x8xbf16>
    %cst_37 = arith.constant dense<0.000000e+00> : vector<1x8x4xf32>
    %121 = tpu.matmul %120, %108, %cst_37 {dimension_numbers = #tpu.dot_dimension_numbers<[2], [1], [1], [2], [0, 0, 0, 1, 1, 2], [0], [0]>} : vector<1x8x8xbf16>, vector<1x8x4xbf16>, vector<1x8x4xf32> -> vector<1x8x4xf32>
    %122 = tpu.concatenate %105, %121 in 2 : vector<1x8x4xf32>, vector<1x8x4xf32> -> vector<1x8x8xf32>
    %123 = vector.shape_cast %122 : vector<1x8x8xf32> to vector<8x8xf32>
    %124 = arith.truncf %123 : vector<8x8xf32> to vector<8x8xbf16>
    %c0_38 = arith.constant 0 : index
    %c0_39 = arith.constant 0 : index
    %c0_40 = arith.constant 0 : index
    %125 = vector.load %arg8[%c0_38, %c0_39, %c0_40] : memref<2x8x8xbf16, #tpu.memory_space<vmem>>, vector<1x8x8xbf16>
    %126 = vector.shape_cast %125 : vector<1x8x8xbf16> to vector<8x8xbf16>
    %cst_41 = arith.constant dense<0.000000e+00> : vector<8x8xf32>
    %127 = tpu.matmul %124, %126, %cst_41 {dimension_numbers = #tpu.dot_dimension_numbers<[1], [0], [0], [1], [0, 0, 1, 1], [], []>} : vector<8x8xbf16>, vector<8x8xbf16>, vector<8x8xf32> -> vector<8x8xf32>
    %128 = arith.addf %49, %127 : vector<8x8xf32>
    %129 = vector.broadcast %55 : vector<1x8xf32> to vector<8x8xf32>
    %130 = arith.addf %128, %129 : vector<8x8xf32>
    %cst_42 = arith.constant dense<0.000000e+00> : vector<8xf32>
    %131 = vector.multi_reduction <add>, %130, %cst_42 [1] : vector<8x8xf32> to vector<8xf32>
    %132 = vector.shape_cast %131 : vector<8xf32> to vector<8x1xf32>
    %cst_43 = arith.constant 8.000000e+00 : f32
    %133 = vector.broadcast %cst_43 : f32 to vector<8x1xf32>
    %134 = arith.divf %132, %133 : vector<8x1xf32>
    %135 = vector.broadcast %134 : vector<8x1xf32> to vector<8x8xf32>
    %136 = arith.subf %130, %135 : vector<8x8xf32>
    %137 = arith.mulf %136, %136 : vector<8x8xf32>
    %cst_44 = arith.constant dense<0.000000e+00> : vector<8xf32>
    %138 = vector.multi_reduction <add>, %137, %cst_44 [1] : vector<8x8xf32> to vector<8xf32>
    %139 = vector.shape_cast %138 : vector<8xf32> to vector<8x1xf32>
    %cst_45 = arith.constant 8.000000e+00 : f32
    %140 = vector.broadcast %cst_45 : f32 to vector<8x1xf32>
    %141 = arith.divf %139, %140 : vector<8x1xf32>
    %142 = vector.broadcast %134 : vector<8x1xf32> to vector<8x8xf32>
    %143 = arith.subf %130, %142 : vector<8x8xf32>
    %cst_46 = arith.constant 9.99999974E-6 : f32
    %144 = vector.broadcast %cst_46 : f32 to vector<8x1xf32>
    %145 = arith.addf %141, %144 : vector<8x1xf32>
    %146 = math.rsqrt %145 : vector<8x1xf32>
    %147 = vector.broadcast %146 : vector<8x1xf32> to vector<8x8xf32>
    %148 = arith.mulf %143, %147 : vector<8x8xf32>
    %149 = vector.broadcast %56 : vector<1x8xf32> to vector<8x8xf32>
    %150 = arith.mulf %148, %149 : vector<8x8xf32>
    %151 = vector.broadcast %57 : vector<1x8xf32> to vector<8x8xf32>
    %152 = arith.addf %150, %151 : vector<8x8xf32>
    %153 = arith.truncf %152 : vector<8x8xf32> to vector<8x8xbf16>
    %c0_47 = arith.constant 0 : index
    %c0_48 = arith.constant 0 : index
    %c0_49 = arith.constant 0 : index
    %154 = vector.load %arg9[%c0_47, %c0_48, %c0_49] : memref<2x8x16xbf16, #tpu.memory_space<vmem>>, vector<1x8x16xbf16>
    %155 = vector.shape_cast %154 : vector<1x8x16xbf16> to vector<8x16xbf16>
    %cst_50 = arith.constant dense<0.000000e+00> : vector<8x16xf32>
    %156 = tpu.matmul %153, %155, %cst_50 {dimension_numbers = #tpu.dot_dimension_numbers<[1], [0], [0], [1], [0, 0, 1, 1], [], []>} : vector<8x8xbf16>, vector<8x16xbf16>, vector<8x16xf32> -> vector<8x16xf32>
    %157 = vector.broadcast %58 : vector<1x16xf32> to vector<8x16xf32>
    %158 = arith.addf %156, %157 : vector<8x16xf32>
    %cst_51 = arith.constant 0.000000e+00 : f32
    %159 = vector.broadcast %cst_51 : f32 to vector<8x16xf32>
    %160 = arith.maximumf %158, %159 : vector<8x16xf32>
    %161 = arith.truncf %160 : vector<8x16xf32> to vector<8x16xbf16>
    %c0_52 = arith.constant 0 : index
    %c0_53 = arith.constant 0 : index
    %c0_54 = arith.constant 0 : index
    %162 = vector.load %arg10[%c0_52, %c0_53, %c0_54] : memref<2x16x8xbf16, #tpu.memory_space<vmem>>, vector<1x16x8xbf16>
    %163 = vector.shape_cast %162 : vector<1x16x8xbf16> to vector<16x8xbf16>
    %cst_55 = arith.constant dense<0.000000e+00> : vector<8x8xf32>
    %164 = tpu.matmul %161, %163, %cst_55 {dimension_numbers = #tpu.dot_dimension_numbers<[1], [0], [0], [1], [0, 0, 1, 1], [], []>} : vector<8x16xbf16>, vector<16x8xbf16>, vector<8x8xf32> -> vector<8x8xf32>
    %165 = arith.addf %130, %164 : vector<8x8xf32>
    %166 = vector.broadcast %59 : vector<1x8xf32> to vector<8x8xf32>
    %167 = arith.addf %165, %166 : vector<8x8xf32>
    %c1 = arith.constant 1 : index
    %c0_56 = arith.constant 0 : index
    %c0_57 = arith.constant 0 : index
    %168 = vector.load %arg11[%c1, %c0_56, %c0_57] : memref<2x8x128xf32, #tpu.memory_space<vmem>>, vector<1x8x128xf32>
    %169 = vector.shape_cast %168 : vector<1x8x128xf32> to vector<8x128xf32>
    %170 = vector.extract_strided_slice %169 {offsets = [0, 0], sizes = [1, 8], strides = [1, 1]} : vector<8x128xf32> to vector<1x8xf32>
    %171 = vector.extract_strided_slice %169 {offsets = [1, 0], sizes = [1, 8], strides = [1, 1]} : vector<8x128xf32> to vector<1x8xf32>
    %172 = vector.extract_strided_slice %169 {offsets = [2, 0], sizes = [1, 24], strides = [1, 1]} : vector<8x128xf32> to vector<1x24xf32>
    %173 = vector.extract_strided_slice %169 {offsets = [3, 0], sizes = [1, 8], strides = [1, 1]} : vector<8x128xf32> to vector<1x8xf32>
    %174 = vector.extract_strided_slice %169 {offsets = [4, 0], sizes = [1, 8], strides = [1, 1]} : vector<8x128xf32> to vector<1x8xf32>
    %175 = vector.extract_strided_slice %169 {offsets = [5, 0], sizes = [1, 8], strides = [1, 1]} : vector<8x128xf32> to vector<1x8xf32>
    %176 = vector.extract_strided_slice %169 {offsets = [6, 0], sizes = [1, 16], strides = [1, 1]} : vector<8x128xf32> to vector<1x16xf32>
    %177 = vector.extract_strided_slice %169 {offsets = [7, 0], sizes = [1, 8], strides = [1, 1]} : vector<8x128xf32> to vector<1x8xf32>
    %cst_58 = arith.constant dense<0.000000e+00> : vector<8xf32>
    %178 = vector.multi_reduction <add>, %167, %cst_58 [1] : vector<8x8xf32> to vector<8xf32>
    %179 = vector.shape_cast %178 : vector<8xf32> to vector<8x1xf32>
    %cst_59 = arith.constant 8.000000e+00 : f32
    %180 = vector.broadcast %cst_59 : f32 to vector<8x1xf32>
    %181 = arith.divf %179, %180 : vector<8x1xf32>
    %182 = vector.broadcast %181 : vector<8x1xf32> to vector<8x8xf32>
    %183 = arith.subf %167, %182 : vector<8x8xf32>
    %184 = arith.mulf %183, %183 : vector<8x8xf32>
    %cst_60 = arith.constant dense<0.000000e+00> : vector<8xf32>
    %185 = vector.multi_reduction <add>, %184, %cst_60 [1] : vector<8x8xf32> to vector<8xf32>
    %186 = vector.shape_cast %185 : vector<8xf32> to vector<8x1xf32>
    %cst_61 = arith.constant 8.000000e+00 : f32
    %187 = vector.broadcast %cst_61 : f32 to vector<8x1xf32>
    %188 = arith.divf %186, %187 : vector<8x1xf32>
    %189 = vector.broadcast %181 : vector<8x1xf32> to vector<8x8xf32>
    %190 = arith.subf %167, %189 : vector<8x8xf32>
    %cst_62 = arith.constant 9.99999974E-6 : f32
    %191 = vector.broadcast %cst_62 : f32 to vector<8x1xf32>
    %192 = arith.addf %188, %191 : vector<8x1xf32>
    %193 = math.rsqrt %192 : vector<8x1xf32>
    %194 = vector.broadcast %193 : vector<8x1xf32> to vector<8x8xf32>
    %195 = arith.mulf %190, %194 : vector<8x8xf32>
    %196 = vector.broadcast %170 : vector<1x8xf32> to vector<8x8xf32>
    %197 = arith.mulf %195, %196 : vector<8x8xf32>
    %198 = vector.broadcast %171 : vector<1x8xf32> to vector<8x8xf32>
    %199 = arith.addf %197, %198 : vector<8x8xf32>
    %200 = arith.truncf %199 : vector<8x8xf32> to vector<8x8xbf16>
    %c1_63 = arith.constant 1 : index
    %c0_64 = arith.constant 0 : index
    %c0_65 = arith.constant 0 : index
    %201 = vector.load %arg7[%c1_63, %c0_64, %c0_65] : memref<2x8x24xbf16, #tpu.memory_space<vmem>>, vector<1x8x24xbf16>
    %202 = vector.shape_cast %201 : vector<1x8x24xbf16> to vector<8x24xbf16>
    %cst_66 = arith.constant dense<0.000000e+00> : vector<8x24xf32>
    %203 = tpu.matmul %200, %202, %cst_66 {dimension_numbers = #tpu.dot_dimension_numbers<[1], [0], [0], [1], [0, 0, 1, 1], [], []>} : vector<8x8xbf16>, vector<8x24xbf16>, vector<8x24xf32> -> vector<8x24xf32>
    %204 = vector.broadcast %172 : vector<1x24xf32> to vector<8x24xf32>
    %205 = arith.addf %203, %204 : vector<8x24xf32>
    %206 = arith.truncf %205 : vector<8x24xf32> to vector<8x24xbf16>
    %207 = vector.shape_cast %206 : vector<8x24xbf16> to vector<1x8x24xbf16>
    %208 = vector.extract_strided_slice %207 {offsets = [0, 0, 0], sizes = [1, 8, 4], strides = [1, 1, 1]} : vector<1x8x24xbf16> to vector<1x8x4xbf16>
    %209 = vector.extract_strided_slice %207 {offsets = [0, 0, 8], sizes = [1, 8, 4], strides = [1, 1, 1]} : vector<1x8x24xbf16> to vector<1x8x4xbf16>
    %210 = vector.extract_strided_slice %207 {offsets = [0, 0, 16], sizes = [1, 8, 4], strides = [1, 1, 1]} : vector<1x8x24xbf16> to vector<1x8x4xbf16>
    %cst_67 = arith.constant dense<0.000000e+00> : vector<1x8x8xf32>
    %211 = tpu.matmul %208, %209, %cst_67 {dimension_numbers = #tpu.dot_dimension_numbers<[2], [2], [1], [1], [0, 0, 0, 1, 1, 1], [0], [0]>} : vector<1x8x4xbf16>, vector<1x8x4xbf16>, vector<1x8x8xf32> -> vector<1x8x8xf32>
    %cst_68 = arith.constant dense<0xFF800000> : vector<1x8xf32>
    %212 = vector.multi_reduction <maximumf>, %211, %cst_68 [2] : vector<1x8x8xf32> to vector<1x8xf32>
    %213 = vector.shape_cast %212 : vector<1x8xf32> to vector<1x8x1xf32>
    %214 = vector.broadcast %213 : vector<1x8x1xf32> to vector<1x8x8xf32>
    %215 = arith.subf %211, %214 : vector<1x8x8xf32>
    %216 = math.exp %215 : vector<1x8x8xf32>
    %cst_69 = arith.constant dense<0.000000e+00> : vector<1x8xf32>
    %217 = vector.multi_reduction <add>, %216, %cst_69 [2] : vector<1x8x8xf32> to vector<1x8xf32>
    %218 = vector.shape_cast %217 : vector<1x8xf32> to vector<1x8x1xf32>
    %219 = tpu.reciprocal %218 {approx = true} : vector<1x8x1xf32> -> vector<1x8x1xf32>
    %220 = vector.broadcast %219 : vector<1x8x1xf32> to vector<1x8x8xf32>
    %221 = arith.mulf %216, %220 : vector<1x8x8xf32>
    %222 = arith.truncf %221 : vector<1x8x8xf32> to vector<1x8x8xbf16>
    %cst_70 = arith.constant dense<0.000000e+00> : vector<1x8x4xf32>
    %223 = tpu.matmul %222, %210, %cst_70 {dimension_numbers = #tpu.dot_dimension_numbers<[2], [1], [1], [2], [0, 0, 0, 1, 1, 2], [0], [0]>} : vector<1x8x8xbf16>, vector<1x8x4xbf16>, vector<1x8x4xf32> -> vector<1x8x4xf32>
    %224 = vector.extract_strided_slice %207 {offsets = [0, 0, 4], sizes = [1, 8, 4], strides = [1, 1, 1]} : vector<1x8x24xbf16> to vector<1x8x4xbf16>
    %225 = vector.extract_strided_slice %207 {offsets = [0, 0, 12], sizes = [1, 8, 4], strides = [1, 1, 1]} : vector<1x8x24xbf16> to vector<1x8x4xbf16>
    %226 = vector.extract_strided_slice %207 {offsets = [0, 0, 20], sizes = [1, 8, 4], strides = [1, 1, 1]} : vector<1x8x24xbf16> to vector<1x8x4xbf16>
    %cst_71 = arith.constant dense<0.000000e+00> : vector<1x8x8xf32>
    %227 = tpu.matmul %224, %225, %cst_71 {dimension_numbers = #tpu.dot_dimension_numbers<[2], [2], [1], [1], [0, 0, 0, 1, 1, 1], [0], [0]>} : vector<1x8x4xbf16>, vector<1x8x4xbf16>, vector<1x8x8xf32> -> vector<1x8x8xf32>
    %cst_72 = arith.constant dense<0xFF800000> : vector<1x8xf32>
    %228 = vector.multi_reduction <maximumf>, %227, %cst_72 [2] : vector<1x8x8xf32> to vector<1x8xf32>
    %229 = vector.shape_cast %228 : vector<1x8xf32> to vector<1x8x1xf32>
    %230 = vector.broadcast %229 : vector<1x8x1xf32> to vector<1x8x8xf32>
    %231 = arith.subf %227, %230 : vector<1x8x8xf32>
    %232 = math.exp %231 : vector<1x8x8xf32>
    %cst_73 = arith.constant dense<0.000000e+00> : vector<1x8xf32>
    %233 = vector.multi_reduction <add>, %232, %cst_73 [2] : vector<1x8x8xf32> to vector<1x8xf32>
    %234 = vector.shape_cast %233 : vector<1x8xf32> to vector<1x8x1xf32>
    %235 = tpu.reciprocal %234 {approx = true} : vector<1x8x1xf32> -> vector<1x8x1xf32>
    %236 = vector.broadcast %235 : vector<1x8x1xf32> to vector<1x8x8xf32>
    %237 = arith.mulf %232, %236 : vector<1x8x8xf32>
    %238 = arith.truncf %237 : vector<1x8x8xf32> to vector<1x8x8xbf16>
    %cst_74 = arith.constant dense<0.000000e+00> : vector<1x8x4xf32>
    %239 = tpu.matmul %238, %226, %cst_74 {dimension_numbers = #tpu.dot_dimension_numbers<[2], [1], [1], [2], [0, 0, 0, 1, 1, 2], [0], [0]>} : vector<1x8x8xbf16>, vector<1x8x4xbf16>, vector<1x8x4xf32> -> vector<1x8x4xf32>
    %240 = tpu.concatenate %223, %239 in 2 : vector<1x8x4xf32>, vector<1x8x4xf32> -> vector<1x8x8xf32>
    %241 = vector.shape_cast %240 : vector<1x8x8xf32> to vector<8x8xf32>
    %242 = arith.truncf %241 : vector<8x8xf32> to vector<8x8xbf16>
    %c1_75 = arith.constant 1 : index
    %c0_76 = arith.constant 0 : index
    %c0_77 = arith.constant 0 : index
    %243 = vector.load %arg8[%c1_75, %c0_76, %c0_77] : memref<2x8x8xbf16, #tpu.memory_space<vmem>>, vector<1x8x8xbf16>
    %244 = vector.shape_cast %243 : vector<1x8x8xbf16> to vector<8x8xbf16>
    %cst_78 = arith.constant dense<0.000000e+00> : vector<8x8xf32>
    %245 = tpu.matmul %242, %244, %cst_78 {dimension_numbers = #tpu.dot_dimension_numbers<[1], [0], [0], [1], [0, 0, 1, 1], [], []>} : vector<8x8xbf16>, vector<8x8xbf16>, vector<8x8xf32> -> vector<8x8xf32>
    %246 = arith.addf %167, %245 : vector<8x8xf32>
    %247 = vector.broadcast %173 : vector<1x8xf32> to vector<8x8xf32>
    %248 = arith.addf %246, %247 : vector<8x8xf32>
    %cst_79 = arith.constant dense<0.000000e+00> : vector<8xf32>
    %249 = vector.multi_reduction <add>, %248, %cst_79 [1] : vector<8x8xf32> to vector<8xf32>
    %250 = vector.shape_cast %249 : vector<8xf32> to vector<8x1xf32>
    %cst_80 = arith.constant 8.000000e+00 : f32
    %251 = vector.broadcast %cst_80 : f32 to vector<8x1xf32>
    %252 = arith.divf %250, %251 : vector<8x1xf32>
    %253 = vector.broadcast %252 : vector<8x1xf32> to vector<8x8xf32>
    %254 = arith.subf %248, %253 : vector<8x8xf32>
    %255 = arith.mulf %254, %254 : vector<8x8xf32>
    %cst_81 = arith.constant dense<0.000000e+00> : vector<8xf32>
    %256 = vector.multi_reduction <add>, %255, %cst_81 [1] : vector<8x8xf32> to vector<8xf32>
    %257 = vector.shape_cast %256 : vector<8xf32> to vector<8x1xf32>
    %cst_82 = arith.constant 8.000000e+00 : f32
    %258 = vector.broadcast %cst_82 : f32 to vector<8x1xf32>
    %259 = arith.divf %257, %258 : vector<8x1xf32>
    %260 = vector.broadcast %252 : vector<8x1xf32> to vector<8x8xf32>
    %261 = arith.subf %248, %260 : vector<8x8xf32>
    %cst_83 = arith.constant 9.99999974E-6 : f32
    %262 = vector.broadcast %cst_83 : f32 to vector<8x1xf32>
    %263 = arith.addf %259, %262 : vector<8x1xf32>
    %264 = math.rsqrt %263 : vector<8x1xf32>
    %265 = vector.broadcast %264 : vector<8x1xf32> to vector<8x8xf32>
    %266 = arith.mulf %261, %265 : vector<8x8xf32>
    %267 = vector.broadcast %174 : vector<1x8xf32> to vector<8x8xf32>
    %268 = arith.mulf %266, %267 : vector<8x8xf32>
    %269 = vector.broadcast %175 : vector<1x8xf32> to vector<8x8xf32>
    %270 = arith.addf %268, %269 : vector<8x8xf32>
    %271 = arith.truncf %270 : vector<8x8xf32> to vector<8x8xbf16>
    %c1_84 = arith.constant 1 : index
    %c0_85 = arith.constant 0 : index
    %c0_86 = arith.constant 0 : index
    %272 = vector.load %arg9[%c1_84, %c0_85, %c0_86] : memref<2x8x16xbf16, #tpu.memory_space<vmem>>, vector<1x8x16xbf16>
    %273 = vector.shape_cast %272 : vector<1x8x16xbf16> to vector<8x16xbf16>
    %cst_87 = arith.constant dense<0.000000e+00> : vector<8x16xf32>
    %274 = tpu.matmul %271, %273, %cst_87 {dimension_numbers = #tpu.dot_dimension_numbers<[1], [0], [0], [1], [0, 0, 1, 1], [], []>} : vector<8x8xbf16>, vector<8x16xbf16>, vector<8x16xf32> -> vector<8x16xf32>
    %275 = vector.broadcast %176 : vector<1x16xf32> to vector<8x16xf32>
    %276 = arith.addf %274, %275 : vector<8x16xf32>
    %cst_88 = arith.constant 0.000000e+00 : f32
    %277 = vector.broadcast %cst_88 : f32 to vector<8x16xf32>
    %278 = arith.maximumf %276, %277 : vector<8x16xf32>
    %279 = arith.truncf %278 : vector<8x16xf32> to vector<8x16xbf16>
    %c1_89 = arith.constant 1 : index
    %c0_90 = arith.constant 0 : index
    %c0_91 = arith.constant 0 : index
    %280 = vector.load %arg10[%c1_89, %c0_90, %c0_91] : memref<2x16x8xbf16, #tpu.memory_space<vmem>>, vector<1x16x8xbf16>
    %281 = vector.shape_cast %280 : vector<1x16x8xbf16> to vector<16x8xbf16>
    %cst_92 = arith.constant dense<0.000000e+00> : vector<8x8xf32>
    %282 = tpu.matmul %279, %281, %cst_92 {dimension_numbers = #tpu.dot_dimension_numbers<[1], [0], [0], [1], [0, 0, 1, 1], [], []>} : vector<8x16xbf16>, vector<16x8xbf16>, vector<8x8xf32> -> vector<8x8xf32>
    %283 = arith.addf %248, %282 : vector<8x8xf32>
    %284 = vector.broadcast %177 : vector<1x8xf32> to vector<8x8xf32>
    %285 = arith.addf %283, %284 : vector<8x8xf32>
    %286 = vector.shape_cast %285 : vector<8x8xf32> to vector<1x8x8xf32>
    %cst_93 = arith.constant dense<0.000000e+00> : vector<1x8xf32>
    %287 = vector.multi_reduction <add>, %286, %cst_93 [1] : vector<1x8x8xf32> to vector<1x8xf32>
    %cst_94 = arith.constant 8.000000e+00 : f32
    %288 = vector.broadcast %cst_94 : f32 to vector<1x8xf32>
    %289 = arith.divf %287, %288 : vector<1x8xf32>
    %290 = arith.truncf %289 : vector<1x8xf32> to vector<1x8xbf16>
    %c0_95 = arith.constant 0 : index
    %c0_96 = arith.constant 0 : index
    %291 = vector.load %arg12[%c0_95, %c0_96] : memref<8x128xbf16, #tpu.memory_space<vmem>>, vector<8x128xbf16>
    %cst_97 = arith.constant dense<0.000000e+00> : vector<1x128xf32>
    %292 = tpu.matmul %290, %291, %cst_97 {dimension_numbers = #tpu.dot_dimension_numbers<[1], [0], [0], [1], [0, 0, 1, 1], [], []>} : vector<1x8xbf16>, vector<8x128xbf16>, vector<1x128xf32> -> vector<1x128xf32>
    %293 = arith.addf %292, %3 : vector<1x128xf32>
    %c0_98 = arith.constant 0 : index
    %c0_99 = arith.constant 0 : index
    %c0_100 = arith.constant 0 : index
    %294 = vector.load %arg13[%c0_98, %c0_99, %c0_100] : memref<1x1x128xf32, #tpu.memory_space<vmem>>, vector<1x1x128xf32>
    %295 = vector.shape_cast %294 : vector<1x1x128xf32> to vector<1x128xf32>
    %296 = vector.shape_cast %293 : vector<1x128xf32> to vector<1x1x128xf32>
    tpu.vector_store %arg13[%c0_98, %c0_99, %c0_100], %296 {strides = array<i32>} : memref<1x1x128xf32, #tpu.memory_space<vmem>>, vector<1x1x128xf32>,
    return
  }
  func.func @transform_0(%arg0: i32) -> (i32, i32, i32) {
    %c0_i32 = arith.constant 0 : i32
    %c0_i32_0 = arith.constant 0 : i32
    %c0_i32_1 = arith.constant 0 : i32
    return %arg0, %c0_i32, %c0_i32_0 : i32, i32, i32
  }
  func.func @transform_1(%arg0: i32) -> (i32, i32) {
    %c0_i32 = arith.constant 0 : i32
    %c0_i32_0 = arith.constant 0 : i32
    %c0_i32_1 = arith.constant 0 : i32
    return %c0_i32, %c0_i32_0 : i32, i32
  }
  func.func @transform_2(%arg0: i32) -> (i32, i32) {
    %c0_i32 = arith.constant 0 : i32
    %c0_i32_0 = arith.constant 0 : i32
    %c0_i32_1 = arith.constant 0 : i32
    return %c0_i32, %c0_i32_0 : i32, i32
  }
  func.func @transform_3(%arg0: i32) -> (i32, i32) {
    %c0_i32 = arith.constant 0 : i32
    %c0_i32_0 = arith.constant 0 : i32
    %c0_i32_1 = arith.constant 0 : i32
    return %c0_i32, %c0_i32_0 : i32, i32
  }
  func.func @transform_4(%arg0: i32) -> (i32, i32) {
    %c0_i32 = arith.constant 0 : i32
    %c0_i32_0 = arith.constant 0 : i32
    %c0_i32_1 = arith.constant 0 : i32
    return %c0_i32, %c0_i32_0 : i32, i32
  }
  func.func @transform_5(%arg0: i32) -> (i32, i32) {
    %c0_i32 = arith.constant 0 : i32
    %c0_i32_0 = arith.constant 0 : i32
    %c0_i32_1 = arith.constant 0 : i32
    return %c0_i32, %c0_i32_0 : i32, i32
  }
  func.func @transform_6(%arg0: i32) -> (i32, i32, i32) {
    %c0_i32 = arith.constant 0 : i32
    %c0_i32_0 = arith.constant 0 : i32
    %c0_i32_1 = arith.constant 0 : i32
    %c0_i32_2 = arith.constant 0 : i32
    return %c0_i32, %c0_i32_0, %c0_i32_1 : i32, i32, i32
  }
  func.func @transform_7(%arg0: i32) -> (i32, i32, i32) {
    %c0_i32 = arith.constant 0 : i32
    %c0_i32_0 = arith.constant 0 : i32
    %c0_i32_1 = arith.constant 0 : i32
    %c0_i32_2 = arith.constant 0 : i32
    return %c0_i32, %c0_i32_0, %c0_i32_1 : i32, i32, i32
  }
  func.func @transform_8(%arg0: i32) -> (i32, i32, i32) {
    %c0_i32 = arith.constant 0 : i32
    %c0_i32_0 = arith.constant 0 : i32
    %c0_i32_1 = arith.constant 0 : i32
    %c0_i32_2 = arith.constant 0 : i32
    return %c0_i32, %c0_i32_0, %c0_i32_1 : i32, i32, i32
  }
  func.func @transform_9(%arg0: i32) -> (i32, i32, i32) {
    %c0_i32 = arith.constant 0 : i32
    %c0_i32_0 = arith.constant 0 : i32
    %c0_i32_1 = arith.constant 0 : i32
    %c0_i32_2 = arith.constant 0 : i32
    return %c0_i32, %c0_i32_0, %c0_i32_1 : i32, i32, i32
  }
  func.func @transform_10(%arg0: i32) -> (i32, i32, i32) {
    %c0_i32 = arith.constant 0 : i32
    %c0_i32_0 = arith.constant 0 : i32
    %c0_i32_1 = arith.constant 0 : i32
    %c0_i32_2 = arith.constant 0 : i32
    return %c0_i32, %c0_i32_0, %c0_i32_1 : i32, i32, i32
  }
  func.func @transform_11(%arg0: i32) -> (i32, i32) {
    %c0_i32 = arith.constant 0 : i32
    %c0_i32_0 = arith.constant 0 : i32
    %c0_i32_1 = arith.constant 0 : i32
    return %c0_i32, %c0_i32_0 : i32, i32
  }
  func.func @transform_12(%arg0: i32) -> (i32, i32, i32) {
    %c0_i32 = arith.constant 0 : i32
    %c0_i32_0 = arith.constant 0 : i32
    %c0_i32_1 = arith.constant 0 : i32
    return %arg0, %c0_i32, %c0_i32_0 : i32, i32, i32
  }
}

</mosaic_0001>

<llo_original>
// kernel: tpu_custom_call.1
$region0: #{tpu_custom_call.1}
  #allocation0 [shape = 'u32[]', space=smem, size = 0x4, offset = 0x4, fixed_abs, tag = 'smem constant byte address 0x4 - core index']
  #allocation1 [shape = 'u32[144,128]{1,0:T(1,128)}', space=vmem, size = 0x12000, scoped, tag = 'internal scratch']
  %s0 = inlined_call_operand.vmem [shape: bf16[2,16,4], index: 0, kind: input, shape index: {}]
  %s1 = inlined_call_operand.vmem [shape: bf16[12,4], index: 1, kind: input, shape index: {}]
  %s2 = inlined_call_operand.vmem [shape: bf16[12,8], index: 2, kind: input, shape index: {}]
  %s3 = inlined_call_operand.vmem [shape: f32[8,128], index: 3, kind: input, shape index: {}]
  %s4 = inlined_call_operand.vmem [shape: bf16[16,2], index: 4, kind: input, shape index: {}]
  %s5 = inlined_call_operand.vmem [shape: bf16[8,16], index: 5, kind: input, shape index: {}]
  %s6 = inlined_call_operand.vmem [shape: bf16[2,8,24], index: 6, kind: input, shape index: {}]
  %s7 = inlined_call_operand.vmem [shape: bf16[2,8,8], index: 7, kind: input, shape index: {}]
  %s8 = inlined_call_operand.vmem [shape: bf16[2,8,16], index: 8, kind: input, shape index: {}]
  %s9 = inlined_call_operand.vmem [shape: bf16[2,16,8], index: 9, kind: input, shape index: {}]
  %s10 = inlined_call_operand.vmem [shape: f32[2,8,128], index: 10, kind: input, shape index: {}]
  %s11 = inlined_call_operand.vmem [shape: bf16[8,128], index: 11, kind: input, shape index: {}]
  %s12 = inlined_call_operand.hbm [shape: f32[2,1,128], index: 12, kind: output, shape index: {}]
  %s13 = sld [smem:[#allocation0]]
  $region81: #{tpu_custom_call.1} parent=0
    _
  %s15 = ssub.s32 1, %s13
  %s16 = scalar_select 0, %s15, %s13
  $region1: #{tpu_custom_call.1} parent=0
    #allocation2 [shape = 'u8[1024]{0}', space=vmem, size = 0x400, scoped, tag = 'output window, operand 0']
    #allocation3 [shape = 's32[2]{0}', space=sflag, size = 0x8, scoped, tag = 'scoped memory for tpu_custom_call.1']
    %17 = vsyncpa [#allocation3], 0
    %s18 = scalar_lea.sflag [#allocation3], 1
    %19 = vsyncpa %s18, 0
    loop: start=0, step=1, limit=4
    $region2: #{tpu_custom_call.1} parent=1 // loop_pre_header
      _
    $region3: #{tpu_custom_call.1} parent=1 // loop_header
      %s21 = sphi 0, %s25
      %p22 = scmp.ge.s32.totalorder %s21, 4
      %s31 = sphi 0, %s33
      %s34 = sphi 0, %s31
      %s35 = sphi 0, %s34
      %s51 = sphi 0, %s35
      %s55 = sphi 0, %s55
      %s57 = sphi 0, %s55
      %s58 = sphi 0, %s57
      %s72 = sphi 0, %s58
      %s76 = sphi 0, %s76
      %s78 = sphi 0, %s76
      %s79 = sphi 0, %s78
      %s93 = sphi 0, %s79
      %s97 = sphi 0, %s97
      %s99 = sphi 0, %s97
      %s100 = sphi 0, %s99
      %s114 = sphi 0, %s100
      %s118 = sphi 0, %s118
      %s120 = sphi 0, %s118
      %s121 = sphi 0, %s120
      %s135 = sphi 0, %s121
      %s139 = sphi 0, %s139
      %s141 = sphi 0, %s139
      %s142 = sphi 0, %s141
      %s156 = sphi 0, %s142
      %s160 = sphi 0, %s160
      %s162 = sphi 0, %s160
      %s163 = sphi 0, %s162
      %s177 = sphi 0, %s163
      %s181 = sphi 0, %s181
      %s183 = sphi 0, %s181
      %s184 = sphi 0, %s183
      %s198 = sphi 0, %s184
      %s202 = sphi 0, %s202
      %s204 = sphi 0, %s202
      %s205 = sphi 0, %s204
      %s219 = sphi 0, %s205
      %s223 = sphi 0, %s223
      %s225 = sphi 0, %s223
      %s226 = sphi 0, %s225
      %s240 = sphi 0, %s226
      %s244 = sphi 0, %s244
      %s246 = sphi 0, %s244
      %s247 = sphi 0, %s246
      %s261 = sphi 0, %s247
      %s265 = sphi 0, %s265
      %s267 = sphi 0, %s265
      %s268 = sphi 0, %s267
      %s282 = sphi 0, %s268
      %s288 = sphi 0, %s290
      %s291 = sphi 0, %s288
      %s292 = sphi 0, %s291
      %s308 = sphi 0, %s292
    $region4: #{tpu_custom_call.1} parent=1 // loop_header_branch
      %24 = sbr.rel (%p22) target = $region8
    $region5: #{tpu_custom_call.1} parent=1 // loop_body
      %s26 = ssub.s32 %s21, 1
      %s27 = ssub.s32 %s21, 2
      %s28 = sadd.s32 %s21, 1
      %s29 = ssub.s32 %s21, %s28
      %p30 = scmp.eq.s32.totalorder %s29, 0
      %s32 = sadd.s32 %s31, 1
      %s33 = scalar_select %p30, %s31, %s32
      %p36 = pneg %p30
      %p37 = scmp.eq.s32.totalorder %s21, 1
      %p38 = por %p36, %p37
      %p39 = scmp.ne.s32.totalorder %s31, %s34
      %p40 = scmp.eq.s32.totalorder %s21, 0
      %p41 = por %p39, %p40
      %p42 = scmp.ne.s32.totalorder %s31, %s34
      %p43 = scmp.eq.s32.totalorder %s26, 1
      %p44 = por %p42, %p43
      %p45 = scmp.ne.s32.totalorder %s34, %s35
      %p46 = scmp.eq.s32.totalorder %s26, 0
      %p47 = por %p45, %p46
      %p48 = scmp.ne.s32.totalorder %s34, %s35
      %p49 = scmp.eq.s32.totalorder %s27, 1
      %p50 = por %p48, %p49
      %p52 = scmp.ne.s32.totalorder %s35, %s51
      %p53 = scmp.eq.s32.totalorder %s27, 0
      %p54 = por %p52, %p53
      %s56 = sadd.s32 %s55, 1
      %p59 = scmp.eq.s32.totalorder %s21, 1
      %p60 = scmp.ne.s32.totalorder %s55, %s57
      %p61 = scmp.eq.s32.totalorder %s21, 0
      %p62 = por %p60, %p61
      %p63 = scmp.ne.s32.totalorder %s55, %s57
      %p64 = scmp.eq.s32.totalorder %s26, 1
      %p65 = por %p63, %p64
      %p66 = scmp.ne.s32.totalorder %s57, %s58
      %p67 = scmp.eq.s32.totalorder %s26, 0
      %p68 = por %p66, %p67
      %p69 = scmp.ne.s32.totalorder %s57, %s58
      %p70 = scmp.eq.s32.totalorder %s27, 1
      %p71 = por %p69, %p70
      %p73 = scmp.ne.s32.totalorder %s58, %s72
      %p74 = scmp.eq.s32.totalorder %s27, 0
      %p75 = por %p73, %p74
      %s77 = sadd.s32 %s76, 1
      %p80 = scmp.eq.s32.totalorder %s21, 1
      %p81 = scmp.ne.s32.totalorder %s76, %s78
      %p82 = scmp.eq.s32.totalorder %s21, 0
      %p83 = por %p81, %p82
      %p84 = scmp.ne.s32.totalorder %s76, %s78
      %p85 = scmp.eq.s32.totalorder %s26, 1
      %p86 = por %p84, %p85
      %p87 = scmp.ne.s32.totalorder %s78, %s79
      %p88 = scmp.eq.s32.totalorder %s26, 0
      %p89 = por %p87, %p88
      %p90 = scmp.ne.s32.totalorder %s78, %s79
      %p91 = scmp.eq.s32.totalorder %s27, 1
      %p92 = por %p90, %p91
      %p94 = scmp.ne.s32.totalorder %s79, %s93
      %p95 = scmp.eq.s32.totalorder %s27, 0
      %p96 = por %p94, %p95
      %s98 = sadd.s32 %s97, 1
      %p101 = scmp.eq.s32.totalorder %s21, 1
      %p102 = scmp.ne.s32.totalorder %s97, %s99
      %p103 = scmp.eq.s32.totalorder %s21, 0
      %p104 = por %p102, %p103
      %p105 = scmp.ne.s32.totalorder %s97, %s99
      %p106 = scmp.eq.s32.totalorder %s26, 1
      %p107 = por %p105, %p106
      %p108 = scmp.ne.s32.totalorder %s99, %s100
      %p109 = scmp.eq.s32.totalorder %s26, 0
      %p110 = por %p108, %p109
      %p111 = scmp.ne.s32.totalorder %s99, %s100
      %p112 = scmp.eq.s32.totalorder %s27, 1
      %p113 = por %p111, %p112
      %p115 = scmp.ne.s32.totalorder %s100, %s114
      %p116 = scmp.eq.s32.totalorder %s27, 0
      %p117 = por %p115, %p116
      %s119 = sadd.s32 %s118, 1
      %p122 = scmp.eq.s32.totalorder %s21, 1
      %p123 = scmp.ne.s32.totalorder %s118, %s120
      %p124 = scmp.eq.s32.totalorder %s21, 0
      %p125 = por %p123, %p124
      %p126 = scmp.ne.s32.totalorder %s118, %s120
      %p127 = scmp.eq.s32.totalorder %s26, 1
      %p128 = por %p126, %p127
      %p129 = scmp.ne.s32.totalorder %s120, %s121
      %p130 = scmp.eq.s32.totalorder %s26, 0
      %p131 = por %p129, %p130
      %p132 = scmp.ne.s32.totalorder %s120, %s121
      %p133 = scmp.eq.s32.totalorder %s27, 1
      %p134 = por %p132, %p133
      %p136 = scmp.ne.s32.totalorder %s121, %s135
      %p137 = scmp.eq.s32.totalorder %s27, 0
      %p138 = por %p136, %p137
      %s140 = sadd.s32 %s139, 1
      %p143 = scmp.eq.s32.totalorder %s21, 1
      %p144 = scmp.ne.s32.totalorder %s139, %s141
      %p145 = scmp.eq.s32.totalorder %s21, 0
      %p146 = por %p144, %p145
      %p147 = scmp.ne.s32.totalorder %s139, %s141
      %p148 = scmp.eq.s32.totalorder %s26, 1
      %p149 = por %p147, %p148
      %p150 = scmp.ne.s32.totalorder %s141, %s142
      %p151 = scmp.eq.s32.totalorder %s26, 0
      %p152 = por %p150, %p151
      %p153 = scmp.ne.s32.totalorder %s141, %s142
      %p154 = scmp.eq.s32.totalorder %s27, 1
      %p155 = por %p153, %p154
      %p157 = scmp.ne.s32.totalorder %s142, %s156
      %p158 = scmp.eq.s32.totalorder %s27, 0
      %p159 = por %p157, %p158
      %s161 = sadd.s32 %s160, 1
      %p164 = scmp.eq.s32.totalorder %s21, 1
      %p165 = scmp.ne.s32.totalorder %s160, %s162
      %p166 = scmp.eq.s32.totalorder %s21, 0
      %p167 = por %p165, %p166
      %p168 = scmp.ne.s32.totalorder %s160, %s162
      %p169 = scmp.eq.s32.totalorder %s26, 1
      %p170 = por %p168, %p169
      %p171 = scmp.ne.s32.totalorder %s162, %s163
      %p172 = scmp.eq.s32.totalorder %s26, 0
      %p173 = por %p171, %p172
      %p174 = scmp.ne.s32.totalorder %s162, %s163
      %p175 = scmp.eq.s32.totalorder %s27, 1
      %p176 = por %p174, %p175
      %p178 = scmp.ne.s32.totalorder %s163, %s177
      %p179 = scmp.eq.s32.totalorder %s27, 0
      %p180 = por %p178, %p179
      %s182 = sadd.s32 %s181, 1
      %p185 = scmp.eq.s32.totalorder %s21, 1
      %p186 = scmp.ne.s32.totalorder %s181, %s183
      %p187 = scmp.eq.s32.totalorder %s21, 0
      %p188 = por %p186, %p187
      %p189 = scmp.ne.s32.totalorder %s181, %s183
      %p190 = scmp.eq.s32.totalorder %s26, 1
      %p191 = por %p189, %p190
      %p192 = scmp.ne.s32.totalorder %s183, %s184
      %p193 = scmp.eq.s32.totalorder %s26, 0
      %p194 = por %p192, %p193
      %p195 = scmp.ne.s32.totalorder %s183, %s184
      %p196 = scmp.eq.s32.totalorder %s27, 1
      %p197 = por %p195, %p196
      %p199 = scmp.ne.s32.totalorder %s184, %s198
      %p200 = scmp.eq.s32.totalorder %s27, 0
      %p201 = por %p199, %p200
      %s203 = sadd.s32 %s202, 1
      %p206 = scmp.eq.s32.totalorder %s21, 1
      %p207 = scmp.ne.s32.totalorder %s202, %s204
      %p208 = scmp.eq.s32.totalorder %s21, 0
      %p209 = por %p207, %p208
      %p210 = scmp.ne.s32.totalorder %s202, %s204
      %p211 = scmp.eq.s32.totalorder %s26, 1
      %p212 = por %p210, %p211
      %p213 = scmp.ne.s32.totalorder %s204, %s205
      %p214 = scmp.eq.s32.totalorder %s26, 0
      %p215 = por %p213, %p214
      %p216 = scmp.ne.s32.totalorder %s204, %s205
      %p217 = scmp.eq.s32.totalorder %s27, 1
      %p218 = por %p216, %p217
      %p220 = scmp.ne.s32.totalorder %s205, %s219
      %p221 = scmp.eq.s32.totalorder %s27, 0
      %p222 = por %p220, %p221
      %s224 = sadd.s32 %s223, 1
      %p227 = scmp.eq.s32.totalorder %s21, 1
      %p228 = scmp.ne.s32.totalorder %s223, %s225
      %p229 = scmp.eq.s32.totalorder %s21, 0
      %p230 = por %p228, %p229
      %p231 = scmp.ne.s32.totalorder %s223, %s225
      %p232 = scmp.eq.s32.totalorder %s26, 1
      %p233 = por %p231, %p232
      %p234 = scmp.ne.s32.totalorder %s225, %s226
      %p235 = scmp.eq.s32.totalorder %s26, 0
      %p236 = por %p234, %p235
      %p237 = scmp.ne.s32.totalorder %s225, %s226
      %p238 = scmp.eq.s32.totalorder %s27, 1
      %p239 = por %p237, %p238
      %p241 = scmp.ne.s32.totalorder %s226, %s240
      %p242 = scmp.eq.s32.totalorder %s27, 0
      %p243 = por %p241, %p242
      %s245 = sadd.s32 %s244, 1
      %p248 = scmp.eq.s32.totalorder %s21, 1
      %p249 = scmp.ne.s32.totalorder %s244, %s246
      %p250 = scmp.eq.s32.totalorder %s21, 0
      %p251 = por %p249, %p250
      %p252 = scmp.ne.s32.totalorder %s244, %s246
      %p253 = scmp.eq.s32.totalorder %s26, 1
      %p254 = por %p252, %p253
      %p255 = scmp.ne.s32.totalorder %s246, %s247
      %p256 = scmp.eq.s32.totalorder %s26, 0
      %p257 = por %p255, %p256
      %p258 = scmp.ne.s32.totalorder %s246, %s247
      %p259 = scmp.eq.s32.totalorder %s27, 1
      %p260 = por %p258, %p259
      %p262 = scmp.ne.s32.totalorder %s247, %s261
      %p263 = scmp.eq.s32.totalorder %s27, 0
      %p264 = por %p262, %p263
      %s266 = sadd.s32 %s265, 1
      %p269 = scmp.eq.s32.totalorder %s21, 1
      %p270 = scmp.ne.s32.totalorder %s265, %s267
      %p271 = scmp.eq.s32.totalorder %s21, 0
      %p272 = por %p270, %p271
      %p273 = scmp.ne.s32.totalorder %s265, %s267
      %p274 = scmp.eq.s32.totalorder %s26, 1
      %p275 = por %p273, %p274
      %p276 = scmp.ne.s32.totalorder %s267, %s268
      %p277 = scmp.eq.s32.totalorder %s26, 0
      %p278 = por %p276, %p277
      %p279 = scmp.ne.s32.totalorder %s267, %s268
      %p280 = scmp.eq.s32.totalorder %s27, 1
      %p281 = por %p279, %p280
      %p283 = scmp.ne.s32.totalorder %s268, %s282
      %p284 = scmp.eq.s32.totalorder %s27, 0
      %p285 = por %p283, %p284
      %s286 = ssub.s32 %s21, %s28
      %p287 = scmp.eq.s32.totalorder %s286, 0
      %s289 = sadd.s32 %s288, 1
      %s290 = scalar_select %p287, %s288, %s289
      %p293 = pneg %p287
      %p294 = scmp.eq.s32.totalorder %s21, 1
      %p295 = por %p293, %p294
      %p296 = scmp.ne.s32.totalorder %s288, %s291
      %p297 = scmp.eq.s32.totalorder %s21, 0
      %p298 = por %p296, %p297
      %p299 = scmp.ne.s32.totalorder %s288, %s291
      %p300 = scmp.eq.s32.totalorder %s26, 1
      %p301 = por %p299, %p300
      %p302 = scmp.ne.s32.totalorder %s291, %s292
      %p303 = scmp.eq.s32.totalorder %s26, 0
      %p304 = por %p302, %p303
      %p305 = scmp.ne.s32.totalorder %s291, %s292
      %p306 = scmp.eq.s32.totalorder %s27, 1
      %p307 = por %p305, %p306
      %p309 = scmp.ne.s32.totalorder %s292, %s308
      %p310 = scmp.eq.s32.totalorder %s27, 0
      %p311 = por %p309, %p310
      %p312 = scmp.le.s32.totalorder 1, %s21
      %p313 = scmp.lt.s32.totalorder %s21, 3
      %p314 = pnand %p312, %p313
      %p315 = pneg %p314
      // Predicated region
      $region9: #{tpu_custom_call.1} parent=5 // pred_check
        _
      $region10: #{tpu_custom_call.1} parent=5 // pred_check_branch
        %317 = sbr.rel (%p314) target = $region12
      $region11: #{tpu_custom_call.1} parent=5 // pred_region
        %s318 = ssub.s32 %s21, 1
        // Predicated region
        $region13: #{tpu_custom_call.1} parent=11 // pred_check
          %p319 = pneg %p68
        $region14: #{tpu_custom_call.1} parent=11 // pred_check_branch
          %321 = sbr.rel (%p319) target = $region16
        $region15: #{tpu_custom_call.1} parent=11 // pred_region
          _
        $region16: #{tpu_custom_call.1} parent=11 // pred_fallthru
          _
        // Predicated region
        $region17: #{tpu_custom_call.1} parent=11 // pred_check
          %p322 = pneg %p89
        $region18: #{tpu_custom_call.1} parent=11 // pred_check_branch
          %324 = sbr.rel (%p322) target = $region20
        $region19: #{tpu_custom_call.1} parent=11 // pred_region
          _
        $region20: #{tpu_custom_call.1} parent=11 // pred_fallthru
          _
        // Predicated region
        $region21: #{tpu_custom_call.1} parent=11 // pred_check
          %p325 = pneg %p110
        $region22: #{tpu_custom_call.1} parent=11 // pred_check_branch
          %327 = sbr.rel (%p325) target = $region24
        $region23: #{tpu_custom_call.1} parent=11 // pred_region
          _
        $region24: #{tpu_custom_call.1} parent=11 // pred_fallthru
          _
        // Predicated region
        $region25: #{tpu_custom_call.1} parent=11 // pred_check
          %p328 = pneg %p131
        $region26: #{tpu_custom_call.1} parent=11 // pred_check_branch
          %330 = sbr.rel (%p328) target = $region28
        $region27: #{tpu_custom_call.1} parent=11 // pred_region
          _
        $region28: #{tpu_custom_call.1} parent=11 // pred_fallthru
          _
        // Predicated region
        $region29: #{tpu_custom_call.1} parent=11 // pred_check
          %p331 = pneg %p152
        $region30: #{tpu_custom_call.1} parent=11 // pred_check_branch
          %333 = sbr.rel (%p331) target = $region32
        $region31: #{tpu_custom_call.1} parent=11 // pred_region
          _
        $region32: #{tpu_custom_call.1} parent=11 // pred_fallthru
          _
        // Predicated region
        $region33: #{tpu_custom_call.1} parent=11 // pred_check
          %p334 = pneg %p173
        $region34: #{tpu_custom_call.1} parent=11 // pred_check_branch
          %336 = sbr.rel (%p334) target = $region36
        $region35: #{tpu_custom_call.1} parent=11 // pred_region
          _
        $region36: #{tpu_custom_call.1} parent=11 // pred_fallthru
          _
        // Predicated region
        $region37: #{tpu_custom_call.1} parent=11 // pred_check
          %p337 = pneg %p194
        $region38: #{tpu_custom_call.1} parent=11 // pred_check_branch
          %339 = sbr.rel (%p337) target = $region40
        $region39: #{tpu_custom_call.1} parent=11 // pred_region
          _
        $region40: #{tpu_custom_call.1} parent=11 // pred_fallthru
          _
        // Predicated region
        $region41: #{tpu_custom_call.1} parent=11 // pred_check
          %p340 = pneg %p215
        $region42: #{tpu_custom_call.1} parent=11 // pred_check_branch
          %342 = sbr.rel (%p340) target = $region44
        $region43: #{tpu_custom_call.1} parent=11 // pred_region
          _
        $region44: #{tpu_custom_call.1} parent=11 // pred_fallthru
          _
        // Predicated region
        $region45: #{tpu_custom_call.1} parent=11 // pred_check
          %p343 = pneg %p236
        $region46: #{tpu_custom_call.1} parent=11 // pred_check_branch
          %345 = sbr.rel (%p343) target = $region48
        $region47: #{tpu_custom_call.1} parent=11 // pred_region
          _
        $region48: #{tpu_custom_call.1} parent=11 // pred_fallthru
          _
        // Predicated region
        $region49: #{tpu_custom_call.1} parent=11 // pred_check
          %p346 = pneg %p257
        $region50: #{tpu_custom_call.1} parent=11 // pred_check_branch
          %348 = sbr.rel (%p346) target = $region52
        $region51: #{tpu_custom_call.1} parent=11 // pred_region
          _
        $region52: #{tpu_custom_call.1} parent=11 // pred_fallthru
          _
        // Predicated region
        $region53: #{tpu_custom_call.1} parent=11 // pred_check
          %p349 = pneg %p278
        $region54: #{tpu_custom_call.1} parent=11 // pred_check_branch
          %351 = sbr.rel (%p349) target = $region56
        $region55: #{tpu_custom_call.1} parent=11 // pred_region
          _
        $region56: #{tpu_custom_call.1} parent=11 // pred_fallthru
          _
      $region12: #{tpu_custom_call.1} parent=5 // pred_fallthru
        _
      %p352 = scmp.lt.s32.totalorder %s21, 2
      // Predicated region
      $region57: #{tpu_custom_call.1} parent=5 // pred_check
        %p353 = pneg %p352
      $region58: #{tpu_custom_call.1} parent=5 // pred_check_branch
        %355 = sbr.rel (%p353) target = $region60
      $region59: #{tpu_custom_call.1} parent=5 // pred_region
        // Predicated region
        $region61: #{tpu_custom_call.1} parent=59 // pred_check
          %p356 = pneg %p41
        $region62: #{tpu_custom_call.1} parent=59 // pred_check_branch
          %358 = sbr.rel (%p356) target = $region64
        $region63: #{tpu_custom_call.1} parent=59 // pred_region
          %p359 = scmp.lt.s32.totalorder %s21, 1
          %s360 = scalar_select %p359, %s21, 1
          %s361 = smul.addr %s360, 2
          %s362 = smul.addr %s361, 4
          %s363 = scalar_lea.vmem %s0, %s362
        $region64: #{tpu_custom_call.1} parent=59 // pred_fallthru
          _
      $region60: #{tpu_custom_call.1} parent=5 // pred_fallthru
        _
      %p364 = scmp.le.s32.totalorder 1, %s21
      %p365 = scmp.lt.s32.totalorder %s21, 3
      %p366 = pnand %p364, %p365
      %p367 = pneg %p366
      // Predicated region
      $region65: #{tpu_custom_call.1} parent=5 // pred_check
        _
      $region66: #{tpu_custom_call.1} parent=5 // pred_check_branch
        %369 = sbr.rel (%p366) target = $region68
      $region67: #{tpu_custom_call.1} parent=5 // pred_region
        %s370 = ssub.s32 %s21, 1
        %p371 = scmp.lt.s32.totalorder %s26, 1
        %s372 = scalar_select %p371, %s26, 1
        %s373 = smul.addr %s372, 2
        %s374 = smul.addr %s373, 4
        %s375 = scalar_lea.vmem %s0, %s374
        %p376 = pneg %p47
        %p377 = pneg %p44
        %p378 = pneg %p68
        %p379 = pneg %p65
        %p380 = pneg %p89
        %p381 = pneg %p86
        %p382 = pneg %p110
        %p383 = pneg %p107
        %p384 = pneg %p131
        %p385 = pneg %p128
        %p386 = pneg %p152
        %p387 = pneg %p149
        %p388 = pneg %p173
        %p389 = pneg %p170
        %p390 = pneg %p194
        %p391 = pneg %p191
        %p392 = pneg %p215
        %p393 = pneg %p212
        %p394 = pneg %p236
        %p395 = pneg %p233
        %p396 = pneg %p257
        %p397 = pneg %p254
        %p398 = pneg %p278
        %p399 = pneg %p275
        %p400 = pneg %p304
        %p401 = pneg %p301
        %s402 = sand.u32 %s291, 1
        %s403 = scalar_lea.sflag [#allocation3], %s402
        %s404 = sand.u32 %s291, 1
        %s405 = scalar_lea.vmem [#allocation2], %s404
        %p406 = scmp.lt.s32.totalorder %s26, 1
        %s407 = scalar_select %p406, %s26, 1
        %s408 = smul.addr %s407, 2
        %s409 = smul.addr %s408, 4
        %s410 = scalar_lea.vmem %s0, %s409
        %v412 = vld [vmem:[%s3] sm:$0xff]
        %v413 = vld [vmem:[%s4] sm:$0xf]
        %v414 = vld [vmem:[%s4 + $0x4] sm:$0xf]
        %v415 = vld [vmem:[%s410] sm:$0xf]
        %v416 = vld [vmem:[%s410 + $0x4] sm:$0xf]
        %v419 = vunpack.c.l.b16 %v415
        %v420 = vunpack.c.l.b16 %v416
        %v421 = vpack.c.b16 %v420, %v419
        %v423 = vshrl.u32 %v421, 16
        %v425 = vrot.slane %v423, 7
        %v426 = vshll.u32 %v421, 16
        %v428 = vor.u32 %v425, %v426
        %vm430 = vcmask 1040384
        %vm431 = vsmask.f32 256
        %vm432 = vmand %vm430, %vm431
        %v433 = vsel %vm432, 0, %v428
        %435 = vset.pattern.permute.xlu0 0
        %436 = vperm.xlu0 %435, %v413
        %v437 = vpop.permute.xlu0 %436
        %v440 = vunpack.c.l.s4 839922192
        %v441 = vunpack.c.0.s8 %v440
        %v442 = vlaneseq
        %v443 = vshrl.u32 %v442, 7
        %v444 = vsub.s32 %v441, %v443
        %v445 = vrot.slane %v437, %v444
        %447 = vset.pattern.permute.xlu0 0
        %448 = vperm.xlu0 %447, %v414
        %v449 = vpop.permute.xlu0 %448
        %v452 = vunpack.c.l.s4 839922192
        %v453 = vunpack.c.0.s8 %v452
        %v454 = vlaneseq
        %v455 = vshrl.u32 %v454, 7
        %v456 = vsub.s32 %v453, %v455
        %v457 = vrot.slane %v449, %v456
        %v460 = vunpack.c.l.b16 %v445
        %v461 = vunpack.c.l.b16 %v457
        %v462 = vpack.c.b16 %v461, %v460
        %v464 = vmul.bf16 %v433, %v462
        %v465 = vrot.slane %v426, 1
        %v466 = vor.u32 %v423, %v465
        %vm468 = vcmask 1047552
        %vm469 = vsmask.f32 7424
        %vm470 = vmand %vm468, %vm469
        %v471 = vsel %vm470, %v466, 0
        %472 = vset.pattern.permute.xlu0 1
        %473 = vperm.xlu0 %472, %v413
        %v474 = vpop.permute.xlu0 %473
        %v477 = vunpack.c.l.s4 839922192
        %v478 = vunpack.c.0.s8 %v477
        %v479 = vlaneseq
        %v480 = vshrl.u32 %v479, 7
        %v481 = vsub.s32 %v478, %v480
        %v482 = vrot.slane %v474, %v481
        %483 = vset.pattern.permute.xlu0 1
        %484 = vperm.xlu0 %483, %v414
        %v485 = vpop.permute.xlu0 %484
        %v488 = vunpack.c.l.s4 839922192
        %v489 = vunpack.c.0.s8 %v488
        %v490 = vlaneseq
        %v491 = vshrl.u32 %v490, 7
        %v492 = vsub.s32 %v489, %v491
        %v493 = vrot.slane %v485, %v492
        %v496 = vunpack.c.l.b16 %v482
        %v497 = vunpack.c.l.b16 %v493
        %v498 = vpack.c.b16 %v497, %v496
        %v500 = vmul.bf16 %v471, %v498
        %501 = vrot.lane.b32.xlu0 %v421, 4
        %v502 = vpop.permute.xlu0 %501
        %504 = vrot.lane.b32.xlu0 %v500, 8
        %v505 = vpop.permute.xlu0 %504
        %vm506 = vcmask 31744
        %v509 = vsel %vm506, %v464, %v502
        %vm510 = vcmask 64512
        %v512 = vsel %vm510, %v509, %v505
        %v513 = vld [vmem:[%s1] sm:$0xf]
        %v514 = vld [vmem:[%s1 + $0x4] sm:$0x3]
        %v515 = vlaneseq
        %v516 = vshrl.u32 %v515, 7
        %v517 = vsub.s32 0, %v516
        %v518 = vrot.slane %v412, %v517
        %v521 = vunpack.c.l.b16 %v513
        %v522 = vunpack.c.l.b16 %v514
        %v523 = vpack.c.b16 %v522, %v521
        %vm524 = vcmask 97280
        %v525 = vsel %vm524, %v512, 0
        %vm527 = vcmask 1045504
        %v529 = vsel %vm527, %v523, 0
        %531 = vmatprep.subr.bf16.mxu0 0
        %532 = vmatpush1.bf16.msra.mxu0 %v529
        %533 = vmatprep.subr.bf16.mxu0 0
        %534 = vmatpush1.bf16.msra.mxu0 0
        %535 = vmatprep.subr.bf16.mxu0 0
        %536 = vmatpush1.bf16.msra.mxu0 0
        %537 = vmatprep.subr.bf16.mxu0 0
        %538 = vmatpush1.bf16.msra.mxu0 0
        %539 = vmatprep.subr.bf16.mxu0 0
        %540 = vmatpush1.bf16.msra.mxu0 0
        %541 = vmatprep.subr.bf16.mxu0 0
        %542 = vmatpush1.bf16.msra.mxu0 0
        %543 = vmatprep.subr.bf16.mxu0 0
        %544 = vmatpush1.bf16.msra.mxu0 0
        %545 = vmatprep.subr.bf16.mxu0 0
        %546 = vmatpush1.bf16.msra.mxu0 0
        %547 = vmatprep.subr.bf16.mxu0 0
        %548 = vmatpush1.bf16.msra.mxu0 0
        %549 = vmatprep.subr.bf16.mxu0 0
        %550 = vmatpush1.bf16.msra.mxu0 0
        %551 = vmatprep.subr.bf16.mxu0 0
        %552 = vmatpush1.bf16.msra.mxu0 0
        %553 = vmatprep.subr.bf16.mxu0 0
        %554 = vmatpush1.bf16.msra.mxu0 0
        %555 = vmatprep.subr.bf16.mxu0 0
        %556 = vmatpush1.bf16.msra.mxu0 0
        %557 = vmatprep.subr.bf16.mxu0 0
        %558 = vmatpush1.bf16.msra.mxu0 0
        %559 = vmatprep.subr.bf16.mxu0 0
        %560 = vmatpush1.bf16.msra.mxu0 0
        %561 = vmatprep.subr.bf16.mxu0 0
        %562 = vmatpush1.bf16.msra.mxu0 0
        %563 = vmatprep.mubr.bf16.mxu0 0
        %564 = vmatmul.mubr.bf16.gmra.mrb[0].mxu0 %v525
        %v565 = vpop.f32.mrb[0].mxu0
        %v566 = vadd.f32 %v518, %v565
        %v567 = vpop.f32.mrb[0].mxu0
        %v568 = vpop.f32.mrb[0].mxu0
        %v569 = vadd.f32 %v518, %v568
        %v570 = vpop.f32.mrb[0].mxu0
        %571 = vdwg.mxu0
        %v572 = vmax.f32 %v566, 0.0
        %v573 = vmax.f32 %v569, 0.0
        %v574 = vpack.c.bf16 %v573, %v572
        %v576 = vshrl.u32 %v574, 16
        %v578 = vrot.slane %v576, 7
        %v579 = vshll.u32 %v574, 16
        %v581 = vor.u32 %v578, %v579
        %v583 = vsel %vm432, 0, %v581
        %v584 = vmul.bf16 %v583, %v462
        %v585 = vrot.slane %v579, 1
        %v586 = vor.u32 %v576, %v585
        %v588 = vsel %vm470, %v586, 0
        %v589 = vmul.bf16 %v588, %v498
        %591 = vrot.lane.b32.xlu0 %v574, 4
        %v592 = vpop.permute.xlu0 %591
        %594 = vrot.lane.b32.xlu0 %v589, 8
        %v595 = vpop.permute.xlu0 %594
        %v598 = vsel %vm506, %v584, %v592
        %v600 = vsel %vm510, %v598, %v595
        %v601 = vld [vmem:[%s2] sm:$0xf]
        %v602 = vld [vmem:[%s2 + $0x4] sm:$0x3]
        %v603 = vlaneseq
        %v604 = vshrl.u32 %v603, 7
        %v605 = vsub.s32 1, %v604
        %v606 = vrot.slane %v412, %v605
        %v609 = vunpack.c.l.b16 %v601
        %v610 = vunpack.c.l.b16 %v602
        %v611 = vpack.c.b16 %v610, %v609
        %v612 = vsel %vm524, %v600, 0
        %v615 = vsel %vm527, %v611, 0
        %617 = vmatprep.subr.bf16.mxu0 0
        %618 = vmatpush1.bf16.msra.mxu0 %v615
        %619 = vmatprep.subr.bf16.mxu0 0
        %620 = vmatpush1.bf16.msra.mxu0 0
        %621 = vmatprep.subr.bf16.mxu0 0
        %622 = vmatpush1.bf16.msra.mxu0 0
        %623 = vmatprep.subr.bf16.mxu0 0
        %624 = vmatpush1.bf16.msra.mxu0 0
        %625 = vmatprep.subr.bf16.mxu0 0
        %626 = vmatpush1.bf16.msra.mxu0 0
        %627 = vmatprep.subr.bf16.mxu0 0
        %628 = vmatpush1.bf16.msra.mxu0 0
        %629 = vmatprep.subr.bf16.mxu0 0
        %630 = vmatpush1.bf16.msra.mxu0 0
        %631 = vmatprep.subr.bf16.mxu0 0
        %632 = vmatpush1.bf16.msra.mxu0 0
        %633 = vmatprep.subr.bf16.mxu0 0
        %634 = vmatpush1.bf16.msra.mxu0 0
        %635 = vmatprep.subr.bf16.mxu0 0
        %636 = vmatpush1.bf16.msra.mxu0 0
        %637 = vmatprep.subr.bf16.mxu0 0
        %638 = vmatpush1.bf16.msra.mxu0 0
        %639 = vmatprep.subr.bf16.mxu0 0
        %640 = vmatpush1.bf16.msra.mxu0 0
        %641 = vmatprep.subr.bf16.mxu0 0
        %642 = vmatpush1.bf16.msra.mxu0 0
        %643 = vmatprep.subr.bf16.mxu0 0
        %644 = vmatpush1.bf16.msra.mxu0 0
        %645 = vmatprep.subr.bf16.mxu0 0
        %646 = vmatpush1.bf16.msra.mxu0 0
        %647 = vmatprep.subr.bf16.mxu0 0
        %648 = vmatpush1.bf16.msra.mxu0 0
        %649 = vmatprep.mubr.bf16.mxu0 0
        %650 = vmatmul.mubr.bf16.gmra.mrb[0].mxu0 %v612
        %v651 = vpop.f32.mrb[0].mxu0
        %v652 = vadd.f32 %v606, %v651
        %v653 = vpop.f32.mrb[0].mxu0
        %v654 = vpop.f32.mrb[0].mxu0
        %v655 = vadd.f32 %v606, %v654
        %v656 = vpop.f32.mrb[0].mxu0
        %657 = vdwg.mxu0
        %v658 = vmax.f32 %v652, 0.0
        %v659 = vmax.f32 %v655, 0.0
        %v660 = vpack.c.bf16 %v659, %v658
        %v661 = vld [vmem:[%s5] sm:$0xf]
        %vm662 = vcmask 130048
        %v664 = vsel %vm662, %v661, 0
        %666 = vmatprep.subr.bf16.mxu0 0
        %667 = vmatpush1.bf16.msra.mxu0 %v660
        %668 = vmatprep.subr.bf16.mxu0 0
        %669 = vmatpush1.bf16.msra.mxu0 0
        %670 = vmatprep.subr.bf16.mxu0 0
        %671 = vmatpush1.bf16.msra.mxu0 0
        %672 = vmatprep.subr.bf16.mxu0 0
        %673 = vmatpush1.bf16.msra.mxu0 0
        %674 = vmatprep.subr.bf16.mxu0 0
        %675 = vmatpush1.bf16.msra.mxu0 0
        %676 = vmatprep.subr.bf16.mxu0 0
        %677 = vmatpush1.bf16.msra.mxu0 0
        %678 = vmatprep.subr.bf16.mxu0 0
        %679 = vmatpush1.bf16.msra.mxu0 0
        %680 = vmatprep.subr.bf16.mxu0 0
        %681 = vmatpush1.bf16.msra.mxu0 0
        %682 = vmatprep.subr.bf16.mxu0 0
        %683 = vmatpush1.bf16.msra.mxu0 0
        %684 = vmatprep.subr.bf16.mxu0 0
        %685 = vmatpush1.bf16.msra.mxu0 0
        %686 = vmatprep.subr.bf16.mxu0 0
        %687 = vmatpush1.bf16.msra.mxu0 0
        %688 = vmatprep.subr.bf16.mxu0 0
        %689 = vmatpush1.bf16.msra.mxu0 0
        %690 = vmatprep.subr.bf16.mxu0 0
        %691 = vmatpush1.bf16.msra.mxu0 0
        %692 = vmatprep.subr.bf16.mxu0 0
        %693 = vmatpush1.bf16.msra.mxu0 0
        %694 = vmatprep.subr.bf16.mxu0 0
        %695 = vmatpush1.bf16.msra.mxu0 0
        %696 = vmatprep.subr.bf16.mxu0 0
        %697 = vmatpush1.bf16.msra.mxu0 0
        %698 = vmatprep.mubr.bf16.mxu0 0
        %699 = vmatmul.mubr.bf16.gmra.mrb[0].mxu0 %v664
        %v700 = vpop.f32.mrb[0].mxu0
        %v701 = vadd.f32 0.0, %v700
        %v702 = vpop.f32.mrb[0].mxu0
        %v703 = vpop.f32.mrb[0].mxu0
        %v704 = vpop.f32.mrb[0].mxu0
        %705 = vdwg.mxu0
        %v706 = vld [vmem:[%s10] sm:$0xff]
        %v707 = vsel %vm510, %v701, 0.0
        %708 = vadd.xlane.f32.xlu0 %v707
        %v709 = vpop.xlane.xlu0 %708
        %v710 = vrcp.pop 8.0
        %v711 = vmul.f32 %v709, %v710
        %v712 = vsub.f32 %v701, %v711
        %v713 = vmul.f32 %v712, %v712
        %v714 = vsel %vm510, %v713, 0.0
        %715 = vadd.xlane.f32.xlu0 %v714
        %v716 = vpop.xlane.xlu0 %715
        %v717 = vmul.f32 %v716, %v710
        %v718 = vadd.f32 %v717, 1e-05
        %v719 = vrsqrt.pop %v718
        %v720 = vmul.f32 %v712, %v719
        %v721 = vlaneseq
        %v722 = vshrl.u32 %v721, 7
        %v723 = vsub.s32 0, %v722
        %v724 = vrot.slane %v706, %v723
        %v725 = vmul.f32 %v720, %v724
        %v726 = vlaneseq
        %v727 = vshrl.u32 %v726, 7
        %v728 = vsub.s32 1, %v727
        %v729 = vrot.slane %v706, %v728
        %v730 = vadd.f32 %v725, %v729
        %v731 = vpack.c.bf16 %v730, %v730
        %v732 = vld [vmem:[%s6] sm:$0xf]
        %v733 = vlaneseq
        %v734 = vshrl.u32 %v733, 7
        %v735 = vsub.s32 2, %v734
        %v736 = vrot.slane %v706, %v735
        %v738 = vsel %vm510, %v731, 0
        %vm740 = vcmask 1043456
        %v742 = vsel %vm740, %v732, 0
        %744 = vmatprep.subr.bf16.mxu0 0
        %745 = vmatpush1.bf16.msra.mxu0 %v742
        %746 = vmatprep.subr.bf16.mxu0 0
        %747 = vmatpush1.bf16.msra.mxu0 0
        %748 = vmatprep.subr.bf16.mxu0 0
        %749 = vmatpush1.bf16.msra.mxu0 0
        %750 = vmatprep.subr.bf16.mxu0 0
        %751 = vmatpush1.bf16.msra.mxu0 0
        %752 = vmatprep.subr.bf16.mxu0 0
        %753 = vmatpush1.bf16.msra.mxu0 0
        %754 = vmatprep.subr.bf16.mxu0 0
        %755 = vmatpush1.bf16.msra.mxu0 0
        %756 = vmatprep.subr.bf16.mxu0 0
        %757 = vmatpush1.bf16.msra.mxu0 0
        %758 = vmatprep.subr.bf16.mxu0 0
        %759 = vmatpush1.bf16.msra.mxu0 0
        %760 = vmatprep.subr.bf16.mxu0 0
        %761 = vmatpush1.bf16.msra.mxu0 0
        %762 = vmatprep.subr.bf16.mxu0 0
        %763 = vmatpush1.bf16.msra.mxu0 0
        %764 = vmatprep.subr.bf16.mxu0 0
        %765 = vmatpush1.bf16.msra.mxu0 0
        %766 = vmatprep.subr.bf16.mxu0 0
        %767 = vmatpush1.bf16.msra.mxu0 0
        %768 = vmatprep.subr.bf16.mxu0 0
        %769 = vmatpush1.bf16.msra.mxu0 0
        %770 = vmatprep.subr.bf16.mxu0 0
        %771 = vmatpush1.bf16.msra.mxu0 0
        %772 = vmatprep.subr.bf16.mxu0 0
        %773 = vmatpush1.bf16.msra.mxu0 0
        %774 = vmatprep.subr.bf16.mxu0 0
        %775 = vmatpush1.bf16.msra.mxu0 0
        %776 = vmatprep.mubr.bf16.mxu0 0
        %777 = vmatmul.mubr.bf16.gmra.mrb[0].mxu0 %v738
        %v778 = vpop.f32.mrb[0].mxu0
        %v779 = vadd.f32 %v736, %v778
        %v780 = vpop.f32.mrb[0].mxu0
        %v781 = vpop.f32.mrb[0].mxu0
        %v782 = vpop.f32.mrb[0].mxu0
        %783 = vdwg.mxu0
        %v784 = vpack.c.bf16 %v779, %v779
        %786 = vrot.lane.b32.xlu0 %v784, 120
        %v787 = vpop.permute.xlu0 %786
        %v789 = vsel %vm506, %v784, 0
        %v792 = vsel %vm506, %v787, 0
        %794 = vmatprep.subr.bf16.mxu0 0
        %795 = vmatpush1.bf16.xpose.msra.mxu0 %v792
        %796 = vmatprep.subr.bf16.mxu0 0
        %797 = vmatpush1.bf16.xpose.msra.mxu0 0
        %798 = vmatprep.subr.bf16.mxu0 0
        %799 = vmatpush1.bf16.xpose.msra.mxu0 0
        %800 = vmatprep.subr.bf16.mxu0 0
        %801 = vmatpush1.bf16.xpose.msra.mxu0 0
        %802 = vmatprep.subr.bf16.mxu0 0
        %803 = vmatpush1.bf16.xpose.msra.mxu0 0
        %804 = vmatprep.subr.bf16.mxu0 0
        %805 = vmatpush1.bf16.xpose.msra.mxu0 0
        %806 = vmatprep.subr.bf16.mxu0 0
        %807 = vmatpush1.bf16.xpose.msra.mxu0 0
        %808 = vmatprep.subr.bf16.mxu0 0
        %809 = vmatpush1.bf16.xpose.msra.mxu0 0
        %810 = vmatprep.subr.bf16.mxu0 0
        %811 = vmatpush1.bf16.xpose.msra.mxu0 0
        %812 = vmatprep.subr.bf16.mxu0 0
        %813 = vmatpush1.bf16.xpose.msra.mxu0 0
        %814 = vmatprep.subr.bf16.mxu0 0
        %815 = vmatpush1.bf16.xpose.msra.mxu0 0
        %816 = vmatprep.subr.bf16.mxu0 0
        %817 = vmatpush1.bf16.xpose.msra.mxu0 0
        %818 = vmatprep.subr.bf16.mxu0 0
        %819 = vmatpush1.bf16.xpose.msra.mxu0 0
        %820 = vmatprep.subr.bf16.mxu0 0
        %821 = vmatpush1.bf16.xpose.msra.mxu0 0
        %822 = vmatprep.subr.bf16.mxu0 0
        %823 = vmatpush1.bf16.xpose.msra.mxu0 0
        %824 = vmatprep.subr.bf16.mxu0 0
        %825 = vmatpush1.bf16.xpose.msra.mxu0 0
        %826 = vmatprep.mubr.bf16.mxu0 0
        %827 = vmatmul.mubr.bf16.gmra.mrb[0].mxu0 %v789
        %v828 = vpop.f32.mrb[0].mxu0
        %v829 = vadd.f32 0.0, %v828
        %v830 = vpop.f32.mrb[0].mxu0
        %v831 = vpop.f32.mrb[0].mxu0
        %v832 = vpop.f32.mrb[0].mxu0
        %833 = vdwg.mxu0
        %v834 = vsel %vm510, %v829, -inf
        %835 = vmax.xlane.f32.xlu0 %v834
        %v836 = vpop.xlane.xlu0 %835
        %v837 = vsub.f32 %v829, %v836
        %v838 = vmul.f32 %v837, 1.442695
        %v839 = vpow.pop %v838
        %v840 = vsel %vm510, %v839, 0.0
        %841 = vadd.xlane.f32.xlu0 %v840
        %v842 = vpop.xlane.xlu0 %841
        %v843 = vrcp.pop %v842
        %v844 = vmul.f32 %v839, %v843
        %v845 = vpack.c.bf16 %v844, %v844
        %846 = vrot.lane.b32.xlu0 %v784, 112
        %v847 = vpop.permute.xlu0 %846
        %v849 = vsel %vm510, %v845, 0
        %v852 = vsel %vm740, %v847, 0
        %854 = vmatprep.subr.bf16.mxu0 0
        %855 = vmatpush1.bf16.msra.mxu0 %v852
        %856 = vmatprep.subr.bf16.mxu0 0
        %857 = vmatpush1.bf16.msra.mxu0 0
        %858 = vmatprep.subr.bf16.mxu0 0
        %859 = vmatpush1.bf16.msra.mxu0 0
        %860 = vmatprep.subr.bf16.mxu0 0
        %861 = vmatpush1.bf16.msra.mxu0 0
        %862 = vmatprep.subr.bf16.mxu0 0
        %863 = vmatpush1.bf16.msra.mxu0 0
        %864 = vmatprep.subr.bf16.mxu0 0
        %865 = vmatpush1.bf16.msra.mxu0 0
        %866 = vmatprep.subr.bf16.mxu0 0
        %867 = vmatpush1.bf16.msra.mxu0 0
        %868 = vmatprep.subr.bf16.mxu0 0
        %869 = vmatpush1.bf16.msra.mxu0 0
        %870 = vmatprep.subr.bf16.mxu0 0
        %871 = vmatpush1.bf16.msra.mxu0 0
        %872 = vmatprep.subr.bf16.mxu0 0
        %873 = vmatpush1.bf16.msra.mxu0 0
        %874 = vmatprep.subr.bf16.mxu0 0
        %875 = vmatpush1.bf16.msra.mxu0 0
        %876 = vmatprep.subr.bf16.mxu0 0
        %877 = vmatpush1.bf16.msra.mxu0 0
        %878 = vmatprep.subr.bf16.mxu0 0
        %879 = vmatpush1.bf16.msra.mxu0 0
        %880 = vmatprep.subr.bf16.mxu0 0
        %881 = vmatpush1.bf16.msra.mxu0 0
        %882 = vmatprep.subr.bf16.mxu0 0
        %883 = vmatpush1.bf16.msra.mxu0 0
        %884 = vmatprep.subr.bf16.mxu0 0
        %885 = vmatpush1.bf16.msra.mxu0 0
        %886 = vmatprep.mubr.bf16.mxu0 0
        %887 = vmatmul.mubr.bf16.gmra.mrb[0].mxu0 %v849
        %v888 = vpop.f32.mrb[0].mxu0
        %v889 = vadd.f32 0.0, %v888
        %v890 = vpop.f32.mrb[0].mxu0
        %v891 = vpop.f32.mrb[0].mxu0
        %v892 = vpop.f32.mrb[0].mxu0
        %893 = vdwg.mxu0
        %894 = vrot.lane.b32.xlu0 %v784, 124
        %v895 = vpop.permute.xlu0 %894
        %896 = vrot.lane.b32.xlu0 %v784, 116
        %v897 = vpop.permute.xlu0 %896
        %v899 = vsel %vm506, %v895, 0
        %v902 = vsel %vm506, %v897, 0
        %904 = vmatprep.subr.bf16.mxu0 0
        %905 = vmatpush1.bf16.xpose.msra.mxu0 %v902
        %906 = vmatprep.subr.bf16.mxu0 0
        %907 = vmatpush1.bf16.xpose.msra.mxu0 0
        %908 = vmatprep.subr.bf16.mxu0 0
        %909 = vmatpush1.bf16.xpose.msra.mxu0 0
        %910 = vmatprep.subr.bf16.mxu0 0
        %911 = vmatpush1.bf16.xpose.msra.mxu0 0
        %912 = vmatprep.subr.bf16.mxu0 0
        %913 = vmatpush1.bf16.xpose.msra.mxu0 0
        %914 = vmatprep.subr.bf16.mxu0 0
        %915 = vmatpush1.bf16.xpose.msra.mxu0 0
        %916 = vmatprep.subr.bf16.mxu0 0
        %917 = vmatpush1.bf16.xpose.msra.mxu0 0
        %918 = vmatprep.subr.bf16.mxu0 0
        %919 = vmatpush1.bf16.xpose.msra.mxu0 0
        %920 = vmatprep.subr.bf16.mxu0 0
        %921 = vmatpush1.bf16.xpose.msra.mxu0 0
        %922 = vmatprep.subr.bf16.mxu0 0
        %923 = vmatpush1.bf16.xpose.msra.mxu0 0
        %924 = vmatprep.subr.bf16.mxu0 0
        %925 = vmatpush1.bf16.xpose.msra.mxu0 0
        %926 = vmatprep.subr.bf16.mxu0 0
        %927 = vmatpush1.bf16.xpose.msra.mxu0 0
        %928 = vmatprep.subr.bf16.mxu0 0
        %929 = vmatpush1.bf16.xpose.msra.mxu0 0
        %930 = vmatprep.subr.bf16.mxu0 0
        %931 = vmatpush1.bf16.xpose.msra.mxu0 0
        %932 = vmatprep.subr.bf16.mxu0 0
        %933 = vmatpush1.bf16.xpose.msra.mxu0 0
        %934 = vmatprep.subr.bf16.mxu0 0
        %935 = vmatpush1.bf16.xpose.msra.mxu0 0
        %936 = vmatprep.mubr.bf16.mxu0 0
        %937 = vmatmul.mubr.bf16.gmra.mrb[0].mxu0 %v899
        %v938 = vpop.f32.mrb[0].mxu0
        %v939 = vadd.f32 0.0, %v938
        %v940 = vpop.f32.mrb[0].mxu0
        %v941 = vpop.f32.mrb[0].mxu0
        %v942 = vpop.f32.mrb[0].mxu0
        %943 = vdwg.mxu0
        %v944 = vsel %vm510, %v939, -inf
        %945 = vmax.xlane.f32.xlu0 %v944
        %v946 = vpop.xlane.xlu0 %945
        %v947 = vsub.f32 %v939, %v946
        %v948 = vmul.f32 %v947, 1.442695
        %v949 = vpow.pop %v948
        %v950 = vsel %vm510, %v949, 0.0
        %951 = vadd.xlane.f32.xlu0 %v950
        %v952 = vpop.xlane.xlu0 %951
        %v953 = vrcp.pop %v952
        %v954 = vmul.f32 %v949, %v953
        %v955 = vpack.c.bf16 %v954, %v954
        %956 = vrot.lane.b32.xlu0 %v784, 108
        %v957 = vpop.permute.xlu0 %956
        %v959 = vsel %vm510, %v955, 0
        %v962 = vsel %vm740, %v957, 0
        %964 = vmatprep.subr.bf16.mxu0 0
        %965 = vmatpush1.bf16.msra.mxu0 %v962
        %966 = vmatprep.subr.bf16.mxu0 0
        %967 = vmatpush1.bf16.msra.mxu0 0
        %968 = vmatprep.subr.bf16.mxu0 0
        %969 = vmatpush1.bf16.msra.mxu0 0
        %970 = vmatprep.subr.bf16.mxu0 0
        %971 = vmatpush1.bf16.msra.mxu0 0
        %972 = vmatprep.subr.bf16.mxu0 0
        %973 = vmatpush1.bf16.msra.mxu0 0
        %974 = vmatprep.subr.bf16.mxu0 0
        %975 = vmatpush1.bf16.msra.mxu0 0
        %976 = vmatprep.subr.bf16.mxu0 0
        %977 = vmatpush1.bf16.msra.mxu0 0
        %978 = vmatprep.subr.bf16.mxu0 0
        %979 = vmatpush1.bf16.msra.mxu0 0
        %980 = vmatprep.subr.bf16.mxu0 0
        %981 = vmatpush1.bf16.msra.mxu0 0
        %982 = vmatprep.subr.bf16.mxu0 0
        %983 = vmatpush1.bf16.msra.mxu0 0
        %984 = vmatprep.subr.bf16.mxu0 0
        %985 = vmatpush1.bf16.msra.mxu0 0
        %986 = vmatprep.subr.bf16.mxu0 0
        %987 = vmatpush1.bf16.msra.mxu0 0
        %988 = vmatprep.subr.bf16.mxu0 0
        %989 = vmatpush1.bf16.msra.mxu0 0
        %990 = vmatprep.subr.bf16.mxu0 0
        %991 = vmatpush1.bf16.msra.mxu0 0
        %992 = vmatprep.subr.bf16.mxu0 0
        %993 = vmatpush1.bf16.msra.mxu0 0
        %994 = vmatprep.subr.bf16.mxu0 0
        %995 = vmatpush1.bf16.msra.mxu0 0
        %996 = vmatprep.mubr.bf16.mxu0 0
        %997 = vmatmul.mubr.bf16.gmra.mrb[0].mxu0 %v959
        %v998 = vpop.f32.mrb[0].mxu0
        %v999 = vadd.f32 0.0, %v998
        %v1000 = vpop.f32.mrb[0].mxu0
        %v1001 = vpop.f32.mrb[0].mxu0
        %v1002 = vpop.f32.mrb[0].mxu0
        %1003 = vdwg.mxu0
        %1005 = vrot.lane.b32.xlu0 %v999, 4
        %v1006 = vpop.permute.xlu0 %1005
        %v1008 = vsel %vm506, %v889, %v1006
        %v1009 = vpack.c.bf16 %v1008, %v1008
        %v1010 = vld [vmem:[%s7] sm:$0xf]
        %v1012 = vsel %vm510, %v1009, 0
        %v1015 = vsel %vm740, %v1010, 0
        %1017 = vmatprep.subr.bf16.mxu0 0
        %1018 = vmatpush1.bf16.msra.mxu0 %v1015
        %1019 = vmatprep.subr.bf16.mxu0 0
        %1020 = vmatpush1.bf16.msra.mxu0 0
        %1021 = vmatprep.subr.bf16.mxu0 0
        %1022 = vmatpush1.bf16.msra.mxu0 0
        %1023 = vmatprep.subr.bf16.mxu0 0
        %1024 = vmatpush1.bf16.msra.mxu0 0
        %1025 = vmatprep.subr.bf16.mxu0 0
        %1026 = vmatpush1.bf16.msra.mxu0 0
        %1027 = vmatprep.subr.bf16.mxu0 0
        %1028 = vmatpush1.bf16.msra.mxu0 0
        %1029 = vmatprep.subr.bf16.mxu0 0
        %1030 = vmatpush1.bf16.msra.mxu0 0
        %1031 = vmatprep.subr.bf16.mxu0 0
        %1032 = vmatpush1.bf16.msra.mxu0 0
        %1033 = vmatprep.subr.bf16.mxu0 0
        %1034 = vmatpush1.bf16.msra.mxu0 0
        %1035 = vmatprep.subr.bf16.mxu0 0
        %1036 = vmatpush1.bf16.msra.mxu0 0
        %1037 = vmatprep.subr.bf16.mxu0 0
        %1038 = vmatpush1.bf16.msra.mxu0 0
        %1039 = vmatprep.subr.bf16.mxu0 0
        %1040 = vmatpush1.bf16.msra.mxu0 0
        %1041 = vmatprep.subr.bf16.mxu0 0
        %1042 = vmatpush1.bf16.msra.mxu0 0
        %1043 = vmatprep.subr.bf16.mxu0 0
        %1044 = vmatpush1.bf16.msra.mxu0 0
        %1045 = vmatprep.subr.bf16.mxu0 0
        %1046 = vmatpush1.bf16.msra.mxu0 0
        %1047 = vmatprep.subr.bf16.mxu0 0
        %1048 = vmatpush1.bf16.msra.mxu0 0
        %1049 = vmatprep.mubr.bf16.mxu0 0
        %1050 = vmatmul.mubr.bf16.gmra.mrb[0].mxu0 %v1012
        %v1051 = vpop.f32.mrb[0].mxu0
        %v1052 = vadd.f32 0.0, %v1051
        %v1053 = vpop.f32.mrb[0].mxu0
        %v1054 = vpop.f32.mrb[0].mxu0
        %v1055 = vpop.f32.mrb[0].mxu0
        %1056 = vdwg.mxu0
        %v1057 = vadd.f32 %v701, %v1052
        %v1058 = vlaneseq
        %v1059 = vshrl.u32 %v1058, 7
        %v1060 = vsub.s32 3, %v1059
        %v1061 = vrot.slane %v706, %v1060
        %v1062 = vadd.f32 %v1057, %v1061
        %v1063 = vsel %vm510, %v1062, 0.0
        %1064 = vadd.xlane.f32.xlu0 %v1063
        %v1065 = vpop.xlane.xlu0 %1064
        %v1066 = vmul.f32 %v1065, %v710
        %v1067 = vsub.f32 %v1062, %v1066
        %v1068 = vmul.f32 %v1067, %v1067
        %v1069 = vsel %vm510, %v1068, 0.0
        %1070 = vadd.xlane.f32.xlu0 %v1069
        %v1071 = vpop.xlane.xlu0 %1070
        %v1072 = vmul.f32 %v1071, %v710
        %v1073 = vadd.f32 %v1072, 1e-05
        %v1074 = vrsqrt.pop %v1073
        %v1075 = vmul.f32 %v1067, %v1074
        %v1076 = vlaneseq
        %v1077 = vshrl.u32 %v1076, 7
        %v1078 = vsub.s32 4, %v1077
        %v1079 = vrot.slane %v706, %v1078
        %v1080 = vmul.f32 %v1075, %v1079
        %v1081 = vlaneseq
        %v1082 = vshrl.u32 %v1081, 7
        %v1083 = vsub.s32 5, %v1082
        %v1084 = vrot.slane %v706, %v1083
        %v1085 = vadd.f32 %v1080, %v1084
        %v1086 = vpack.c.bf16 %v1085, %v1085
        %v1087 = vld [vmem:[%s8] sm:$0xf]
        %v1088 = vlaneseq
        %v1089 = vshrl.u32 %v1088, 7
        %v1090 = vsub.s32 6, %v1089
        %v1091 = vrot.slane %v706, %v1090
        %v1093 = vsel %vm510, %v1086, 0
        %v1096 = vsel %vm740, %v1087, 0
        %1098 = vmatprep.subr.bf16.mxu0 0
        %1099 = vmatpush1.bf16.msra.mxu0 %v1096
        %1100 = vmatprep.subr.bf16.mxu0 0
        %1101 = vmatpush1.bf16.msra.mxu0 0
        %1102 = vmatprep.subr.bf16.mxu0 0
        %1103 = vmatpush1.bf16.msra.mxu0 0
        %1104 = vmatprep.subr.bf16.mxu0 0
        %1105 = vmatpush1.bf16.msra.mxu0 0
        %1106 = vmatprep.subr.bf16.mxu0 0
        %1107 = vmatpush1.bf16.msra.mxu0 0
        %1108 = vmatprep.subr.bf16.mxu0 0
        %1109 = vmatpush1.bf16.msra.mxu0 0
        %1110 = vmatprep.subr.bf16.mxu0 0
        %1111 = vmatpush1.bf16.msra.mxu0 0
        %1112 = vmatprep.subr.bf16.mxu0 0
        %1113 = vmatpush1.bf16.msra.mxu0 0
        %1114 = vmatprep.subr.bf16.mxu0 0
        %1115 = vmatpush1.bf16.msra.mxu0 0
        %1116 = vmatprep.subr.bf16.mxu0 0
        %1117 = vmatpush1.bf16.msra.mxu0 0
        %1118 = vmatprep.subr.bf16.mxu0 0
        %1119 = vmatpush1.bf16.msra.mxu0 0
        %1120 = vmatprep.subr.bf16.mxu0 0
        %1121 = vmatpush1.bf16.msra.mxu0 0
        %1122 = vmatprep.subr.bf16.mxu0 0
        %1123 = vmatpush1.bf16.msra.mxu0 0
        %1124 = vmatprep.subr.bf16.mxu0 0
        %1125 = vmatpush1.bf16.msra.mxu0 0
        %1126 = vmatprep.subr.bf16.mxu0 0
        %1127 = vmatpush1.bf16.msra.mxu0 0
        %1128 = vmatprep.subr.bf16.mxu0 0
        %1129 = vmatpush1.bf16.msra.mxu0 0
        %1130 = vmatprep.mubr.bf16.mxu0 0
        %1131 = vmatmul.mubr.bf16.gmra.mrb[0].mxu0 %v1093
        %v1132 = vpop.f32.mrb[0].mxu0
        %v1133 = vadd.f32 %v1091, %v1132
        %v1134 = vpop.f32.mrb[0].mxu0
        %v1135 = vpop.f32.mrb[0].mxu0
        %v1136 = vpop.f32.mrb[0].mxu0
        %1137 = vdwg.mxu0
        %v1138 = vmax.f32 %v1133, 0.0
        %v1139 = vpack.c.bf16 %v1138, %v1138
        %v1140 = vld [vmem:[%s9] sm:$0xf]
        %v1141 = vld [vmem:[%s9 + $0x4] sm:$0xf]
        %v1144 = vunpack.c.l.b16 %v1140
        %v1145 = vunpack.c.l.b16 %v1141
        %v1146 = vpack.c.b16 %v1145, %v1144
        %v1149 = vsel %vm662, %v1139, 0
        %1151 = vmatprep.subr.bf16.mxu0 0
        %1152 = vmatpush1.bf16.msra.mxu0 %v1146
        %1153 = vmatprep.subr.bf16.mxu0 0
        %1154 = vmatpush1.bf16.msra.mxu0 0
        %1155 = vmatprep.subr.bf16.mxu0 0
        %1156 = vmatpush1.bf16.msra.mxu0 0
        %1157 = vmatprep.subr.bf16.mxu0 0
        %1158 = vmatpush1.bf16.msra.mxu0 0
        %1159 = vmatprep.subr.bf16.mxu0 0
        %1160 = vmatpush1.bf16.msra.mxu0 0
        %1161 = vmatprep.subr.bf16.mxu0 0
        %1162 = vmatpush1.bf16.msra.mxu0 0
        %1163 = vmatprep.subr.bf16.mxu0 0
        %1164 = vmatpush1.bf16.msra.mxu0 0
        %1165 = vmatprep.subr.bf16.mxu0 0
        %1166 = vmatpush1.bf16.msra.mxu0 0
        %1167 = vmatprep.subr.bf16.mxu0 0
        %1168 = vmatpush1.bf16.msra.mxu0 0
        %1169 = vmatprep.subr.bf16.mxu0 0
        %1170 = vmatpush1.bf16.msra.mxu0 0
        %1171 = vmatprep.subr.bf16.mxu0 0
        %1172 = vmatpush1.bf16.msra.mxu0 0
        %1173 = vmatprep.subr.bf16.mxu0 0
        %1174 = vmatpush1.bf16.msra.mxu0 0
        %1175 = vmatprep.subr.bf16.mxu0 0
        %1176 = vmatpush1.bf16.msra.mxu0 0
        %1177 = vmatprep.subr.bf16.mxu0 0
        %1178 = vmatpush1.bf16.msra.mxu0 0
        %1179 = vmatprep.subr.bf16.mxu0 0
        %1180 = vmatpush1.bf16.msra.mxu0 0
        %1181 = vmatprep.subr.bf16.mxu0 0
        %1182 = vmatpush1.bf16.msra.mxu0 0
        %1183 = vmatprep.mubr.bf16.mxu0 0
        %1184 = vmatmul.mubr.bf16.gmra.mrb[0].mxu0 %v1149
        %v1185 = vpop.f32.mrb[0].mxu0
        %v1186 = vadd.f32 0.0, %v1185
        %v1187 = vpop.f32.mrb[0].mxu0
        %v1188 = vpop.f32.mrb[0].mxu0
        %v1189 = vpop.f32.mrb[0].mxu0
        %1190 = vdwg.mxu0
        %v1191 = vadd.f32 %v1062, %v1186
        %v1192 = vlaneseq
        %v1193 = vshrl.u32 %v1192, 7
        %v1194 = vsub.s32 7, %v1193
        %v1195 = vrot.slane %v706, %v1194
        %v1196 = vadd.f32 %v1191, %v1195
        %s1197 = scalar_lea.vmem %s10, 8
        %v1198 = vld [vmem:[%s1197] sm:$0xff]
        %v1199 = vsel %vm510, %v1196, 0.0
        %1200 = vadd.xlane.f32.xlu0 %v1199
        %v1201 = vpop.xlane.xlu0 %1200
        %v1202 = vmul.f32 %v1201, %v710
        %v1203 = vsub.f32 %v1196, %v1202
        %v1204 = vmul.f32 %v1203, %v1203
        %v1205 = vsel %vm510, %v1204, 0.0
        %1206 = vadd.xlane.f32.xlu0 %v1205
        %v1207 = vpop.xlane.xlu0 %1206
        %v1208 = vmul.f32 %v1207, %v710
        %v1209 = vadd.f32 %v1208, 1e-05
        %v1210 = vrsqrt.pop %v1209
        %v1211 = vmul.f32 %v1203, %v1210
        %v1212 = vlaneseq
        %v1213 = vshrl.u32 %v1212, 7
        %v1214 = vsub.s32 0, %v1213
        %v1215 = vrot.slane %v1198, %v1214
        %v1216 = vmul.f32 %v1211, %v1215
        %v1217 = vlaneseq
        %v1218 = vshrl.u32 %v1217, 7
        %v1219 = vsub.s32 1, %v1218
        %v1220 = vrot.slane %v1198, %v1219
        %v1221 = vadd.f32 %v1216, %v1220
        %v1222 = vpack.c.bf16 %v1221, %v1221
        %s1223 = scalar_lea.vmem %s6, 4
        %v1224 = vld [vmem:[%s1223] sm:$0xf]
        %v1225 = vlaneseq
        %v1226 = vshrl.u32 %v1225, 7
        %v1227 = vsub.s32 2, %v1226
        %v1228 = vrot.slane %v1198, %v1227
        %v1230 = vsel %vm510, %v1222, 0
        %v1233 = vsel %vm740, %v1224, 0
        %1235 = vmatprep.subr.bf16.mxu0 0
        %1236 = vmatpush1.bf16.msra.mxu0 %v1233
        %1237 = vmatprep.subr.bf16.mxu0 0
        %1238 = vmatpush1.bf16.msra.mxu0 0
        %1239 = vmatprep.subr.bf16.mxu0 0
        %1240 = vmatpush1.bf16.msra.mxu0 0
        %1241 = vmatprep.subr.bf16.mxu0 0
        %1242 = vmatpush1.bf16.msra.mxu0 0
        %1243 = vmatprep.subr.bf16.mxu0 0
        %1244 = vmatpush1.bf16.msra.mxu0 0
        %1245 = vmatprep.subr.bf16.mxu0 0
        %1246 = vmatpush1.bf16.msra.mxu0 0
        %1247 = vmatprep.subr.bf16.mxu0 0
        %1248 = vmatpush1.bf16.msra.mxu0 0
        %1249 = vmatprep.subr.bf16.mxu0 0
        %1250 = vmatpush1.bf16.msra.mxu0 0
        %1251 = vmatprep.subr.bf16.mxu0 0
        %1252 = vmatpush1.bf16.msra.mxu0 0
        %1253 = vmatprep.subr.bf16.mxu0 0
        %1254 = vmatpush1.bf16.msra.mxu0 0
        %1255 = vmatprep.subr.bf16.mxu0 0
        %1256 = vmatpush1.bf16.msra.mxu0 0
        %1257 = vmatprep.subr.bf16.mxu0 0
        %1258 = vmatpush1.bf16.msra.mxu0 0
        %1259 = vmatprep.subr.bf16.mxu0 0
        %1260 = vmatpush1.bf16.msra.mxu0 0
        %1261 = vmatprep.subr.bf16.mxu0 0
        %1262 = vmatpush1.bf16.msra.mxu0 0
        %1263 = vmatprep.subr.bf16.mxu0 0
        %1264 = vmatpush1.bf16.msra.mxu0 0
        %1265 = vmatprep.subr.bf16.mxu0 0
        %1266 = vmatpush1.bf16.msra.mxu0 0
        %1267 = vmatprep.mubr.bf16.mxu0 0
        %1268 = vmatmul.mubr.bf16.gmra.mrb[0].mxu0 %v1230
        %v1269 = vpop.f32.mrb[0].mxu0
        %v1270 = vadd.f32 %v1228, %v1269
        %v1271 = vpop.f32.mrb[0].mxu0
        %v1272 = vpop.f32.mrb[0].mxu0
        %v1273 = vpop.f32.mrb[0].mxu0
        %1274 = vdwg.mxu0
        %v1275 = vpack.c.bf16 %v1270, %v1270
        %1277 = vrot.lane.b32.xlu0 %v1275, 120
        %v1278 = vpop.permute.xlu0 %1277
        %v1280 = vsel %vm506, %v1275, 0
        %v1283 = vsel %vm506, %v1278, 0
        %1285 = vmatprep.subr.bf16.mxu0 0
        %1286 = vmatpush1.bf16.xpose.msra.mxu0 %v1283
        %1287 = vmatprep.subr.bf16.mxu0 0
        %1288 = vmatpush1.bf16.xpose.msra.mxu0 0
        %1289 = vmatprep.subr.bf16.mxu0 0
        %1290 = vmatpush1.bf16.xpose.msra.mxu0 0
        %1291 = vmatprep.subr.bf16.mxu0 0
        %1292 = vmatpush1.bf16.xpose.msra.mxu0 0
        %1293 = vmatprep.subr.bf16.mxu0 0
        %1294 = vmatpush1.bf16.xpose.msra.mxu0 0
        %1295 = vmatprep.subr.bf16.mxu0 0
        %1296 = vmatpush1.bf16.xpose.msra.mxu0 0
        %1297 = vmatprep.subr.bf16.mxu0 0
        %1298 = vmatpush1.bf16.xpose.msra.mxu0 0
        %1299 = vmatprep.subr.bf16.mxu0 0
        %1300 = vmatpush1.bf16.xpose.msra.mxu0 0
        %1301 = vmatprep.subr.bf16.mxu0 0
        %1302 = vmatpush1.bf16.xpose.msra.mxu0 0
        %1303 = vmatprep.subr.bf16.mxu0 0
        %1304 = vmatpush1.bf16.xpose.msra.mxu0 0
        %1305 = vmatprep.subr.bf16.mxu0 0
        %1306 = vmatpush1.bf16.xpose.msra.mxu0 0
        %1307 = vmatprep.subr.bf16.mxu0 0
        %1308 = vmatpush1.bf16.xpose.msra.mxu0 0
        %1309 = vmatprep.subr.bf16.mxu0 0
        %1310 = vmatpush1.bf16.xpose.msra.mxu0 0
        %1311 = vmatprep.subr.bf16.mxu0 0
        %1312 = vmatpush1.bf16.xpose.msra.mxu0 0
        %1313 = vmatprep.subr.bf16.mxu0 0
        %1314 = vmatpush1.bf16.xpose.msra.mxu0 0
        %1315 = vmatprep.subr.bf16.mxu0 0
        %1316 = vmatpush1.bf16.xpose.msra.mxu0 0
        %1317 = vmatprep.mubr.bf16.mxu0 0
        %1318 = vmatmul.mubr.bf16.gmra.mrb[0].mxu0 %v1280
        %v1319 = vpop.f32.mrb[0].mxu0
        %v1320 = vadd.f32 0.0, %v1319
        %v1321 = vpop.f32.mrb[0].mxu0
        %v1322 = vpop.f32.mrb[0].mxu0
        %v1323 = vpop.f32.mrb[0].mxu0
        %1324 = vdwg.mxu0
        %v1325 = vsel %vm510, %v1320, -inf
        %1326 = vmax.xlane.f32.xlu0 %v1325
        %v1327 = vpop.xlane.xlu0 %1326
        %v1328 = vsub.f32 %v1320, %v1327
        %v1329 = vmul.f32 %v1328, 1.442695
        %v1330 = vpow.pop %v1329
        %v1331 = vsel %vm510, %v1330, 0.0
        %1332 = vadd.xlane.f32.xlu0 %v1331
        %v1333 = vpop.xlane.xlu0 %1332
        %v1334 = vrcp.pop %v1333
        %v1335 = vmul.f32 %v1330, %v1334
        %v1336 = vpack.c.bf16 %v1335, %v1335
        %1337 = vrot.lane.b32.xlu0 %v1275, 112
        %v1338 = vpop.permute.xlu0 %1337
        %v1340 = vsel %vm510, %v1336, 0
        %v1343 = vsel %vm740, %v1338, 0
        %1345 = vmatprep.subr.bf16.mxu0 0
        %1346 = vmatpush1.bf16.msra.mxu0 %v1343
        %1347 = vmatprep.subr.bf16.mxu0 0
        %1348 = vmatpush1.bf16.msra.mxu0 0
        %1349 = vmatprep.subr.bf16.mxu0 0
        %1350 = vmatpush1.bf16.msra.mxu0 0
        %1351 = vmatprep.subr.bf16.mxu0 0
        %1352 = vmatpush1.bf16.msra.mxu0 0
        %1353 = vmatprep.subr.bf16.mxu0 0
        %1354 = vmatpush1.bf16.msra.mxu0 0
        %1355 = vmatprep.subr.bf16.mxu0 0
        %1356 = vmatpush1.bf16.msra.mxu0 0
        %1357 = vmatprep.subr.bf16.mxu0 0
        %1358 = vmatpush1.bf16.msra.mxu0 0
        %1359 = vmatprep.subr.bf16.mxu0 0
        %1360 = vmatpush1.bf16.msra.mxu0 0
        %1361 = vmatprep.subr.bf16.mxu0 0
        %1362 = vmatpush1.bf16.msra.mxu0 0
        %1363 = vmatprep.subr.bf16.mxu0 0
        %1364 = vmatpush1.bf16.msra.mxu0 0
        %1365 = vmatprep.subr.bf16.mxu0 0
        %1366 = vmatpush1.bf16.msra.mxu0 0
        %1367 = vmatprep.subr.bf16.mxu0 0
        %1368 = vmatpush1.bf16.msra.mxu0 0
        %1369 = vmatprep.subr.bf16.mxu0 0
        %1370 = vmatpush1.bf16.msra.mxu0 0
        %1371 = vmatprep.subr.bf16.mxu0 0
        %1372 = vmatpush1.bf16.msra.mxu0 0
        %1373 = vmatprep.subr.bf16.mxu0 0
        %1374 = vmatpush1.bf16.msra.mxu0 0
        %1375 = vmatprep.subr.bf16.mxu0 0
        %1376 = vmatpush1.bf16.msra.mxu0 0
        %1377 = vmatprep.mubr.bf16.mxu0 0
        %1378 = vmatmul.mubr.bf16.gmra.mrb[0].mxu0 %v1340
        %v1379 = vpop.f32.mrb[0].mxu0
        %v1380 = vadd.f32 0.0, %v1379
        %v1381 = vpop.f32.mrb[0].mxu0
        %v1382 = vpop.f32.mrb[0].mxu0
        %v1383 = vpop.f32.mrb[0].mxu0
        %1384 = vdwg.mxu0
        %1385 = vrot.lane.b32.xlu0 %v1275, 124
        %v1386 = vpop.permute.xlu0 %1385
        %1387 = vrot.lane.b32.xlu0 %v1275, 116
        %v1388 = vpop.permute.xlu0 %1387
        %v1390 = vsel %vm506, %v1386, 0
        %v1393 = vsel %vm506, %v1388, 0
        %1395 = vmatprep.subr.bf16.mxu0 0
        %1396 = vmatpush1.bf16.xpose.msra.mxu0 %v1393
        %1397 = vmatprep.subr.bf16.mxu0 0
        %1398 = vmatpush1.bf16.xpose.msra.mxu0 0
        %1399 = vmatprep.subr.bf16.mxu0 0
        %1400 = vmatpush1.bf16.xpose.msra.mxu0 0
        %1401 = vmatprep.subr.bf16.mxu0 0
        %1402 = vmatpush1.bf16.xpose.msra.mxu0 0
        %1403 = vmatprep.subr.bf16.mxu0 0
        %1404 = vmatpush1.bf16.xpose.msra.mxu0 0
        %1405 = vmatprep.subr.bf16.mxu0 0
        %1406 = vmatpush1.bf16.xpose.msra.mxu0 0
        %1407 = vmatprep.subr.bf16.mxu0 0
        %1408 = vmatpush1.bf16.xpose.msra.mxu0 0
        %1409 = vmatprep.subr.bf16.mxu0 0
        %1410 = vmatpush1.bf16.xpose.msra.mxu0 0
        %1411 = vmatprep.subr.bf16.mxu0 0
        %1412 = vmatpush1.bf16.xpose.msra.mxu0 0
        %1413 = vmatprep.subr.bf16.mxu0 0
        %1414 = vmatpush1.bf16.xpose.msra.mxu0 0
        %1415 = vmatprep.subr.bf16.mxu0 0
        %1416 = vmatpush1.bf16.xpose.msra.mxu0 0
        %1417 = vmatprep.subr.bf16.mxu0 0
        %1418 = vmatpush1.bf16.xpose.msra.mxu0 0
        %1419 = vmatprep.subr.bf16.mxu0 0
        %1420 = vmatpush1.bf16.xpose.msra.mxu0 0
        %1421 = vmatprep.subr.bf16.mxu0 0
        %1422 = vmatpush1.bf16.xpose.msra.mxu0 0
        %1423 = vmatprep.subr.bf16.mxu0 0
        %1424 = vmatpush1.bf16.xpose.msra.mxu0 0
        %1425 = vmatprep.subr.bf16.mxu0 0
        %1426 = vmatpush1.bf16.xpose.msra.mxu0 0
        %1427 = vmatprep.mubr.bf16.mxu0 0
        %1428 = vmatmul.mubr.bf16.gmra.mrb[0].mxu0 %v1390
        %v1429 = vpop.f32.mrb[0].mxu0
        %v1430 = vadd.f32 0.0, %v1429
        %v1431 = vpop.f32.mrb[0].mxu0
        %v1432 = vpop.f32.mrb[0].mxu0
        %v1433 = vpop.f32.mrb[0].mxu0
        %1434 = vdwg.mxu0
        %v1435 = vsel %vm510, %v1430, -inf
        %1436 = vmax.xlane.f32.xlu0 %v1435
        %v1437 = vpop.xlane.xlu0 %1436
        %v1438 = vsub.f32 %v1430, %v1437
        %v1439 = vmul.f32 %v1438, 1.442695
        %v1440 = vpow.pop %v1439
        %v1441 = vsel %vm510, %v1440, 0.0
        %1442 = vadd.xlane.f32.xlu0 %v1441
        %v1443 = vpop.xlane.xlu0 %1442
        %v1444 = vrcp.pop %v1443
        %v1445 = vmul.f32 %v1440, %v1444
        %v1446 = vpack.c.bf16 %v1445, %v1445
        %1447 = vrot.lane.b32.xlu0 %v1275, 108
        %v1448 = vpop.permute.xlu0 %1447
        %v1450 = vsel %vm510, %v1446, 0
        %v1453 = vsel %vm740, %v1448, 0
        %1455 = vmatprep.subr.bf16.mxu0 0
        %1456 = vmatpush1.bf16.msra.mxu0 %v1453
        %1457 = vmatprep.subr.bf16.mxu0 0
        %1458 = vmatpush1.bf16.msra.mxu0 0
        %1459 = vmatprep.subr.bf16.mxu0 0
        %1460 = vmatpush1.bf16.msra.mxu0 0
        %1461 = vmatprep.subr.bf16.mxu0 0
        %1462 = vmatpush1.bf16.msra.mxu0 0
        %1463 = vmatprep.subr.bf16.mxu0 0
        %1464 = vmatpush1.bf16.msra.mxu0 0
        %1465 = vmatprep.subr.bf16.mxu0 0
        %1466 = vmatpush1.bf16.msra.mxu0 0
        %1467 = vmatprep.subr.bf16.mxu0 0
        %1468 = vmatpush1.bf16.msra.mxu0 0
        %1469 = vmatprep.subr.bf16.mxu0 0
        %1470 = vmatpush1.bf16.msra.mxu0 0
        %1471 = vmatprep.subr.bf16.mxu0 0
        %1472 = vmatpush1.bf16.msra.mxu0 0
        %1473 = vmatprep.subr.bf16.mxu0 0
        %1474 = vmatpush1.bf16.msra.mxu0 0
        %1475 = vmatprep.subr.bf16.mxu0 0
        %1476 = vmatpush1.bf16.msra.mxu0 0
        %1477 = vmatprep.subr.bf16.mxu0 0
        %1478 = vmatpush1.bf16.msra.mxu0 0
        %1479 = vmatprep.subr.bf16.mxu0 0
        %1480 = vmatpush1.bf16.msra.mxu0 0
        %1481 = vmatprep.subr.bf16.mxu0 0
        %1482 = vmatpush1.bf16.msra.mxu0 0
        %1483 = vmatprep.subr.bf16.mxu0 0
        %1484 = vmatpush1.bf16.msra.mxu0 0
        %1485 = vmatprep.subr.bf16.mxu0 0
        %1486 = vmatpush1.bf16.msra.mxu0 0
        %1487 = vmatprep.mubr.bf16.mxu0 0
        %1488 = vmatmul.mubr.bf16.gmra.mrb[0].mxu0 %v1450
        %v1489 = vpop.f32.mrb[0].mxu0
        %v1490 = vadd.f32 0.0, %v1489
        %v1491 = vpop.f32.mrb[0].mxu0
        %v1492 = vpop.f32.mrb[0].mxu0
        %v1493 = vpop.f32.mrb[0].mxu0
        %1494 = vdwg.mxu0
        %1496 = vrot.lane.b32.xlu0 %v1490, 4
        %v1497 = vpop.permute.xlu0 %1496
        %v1499 = vsel %vm506, %v1380, %v1497
        %v1500 = vpack.c.bf16 %v1499, %v1499
        %s1501 = scalar_lea.vmem %s7, 4
        %v1502 = vld [vmem:[%s1501] sm:$0xf]
        %v1504 = vsel %vm510, %v1500, 0
        %v1507 = vsel %vm740, %v1502, 0
        %1509 = vmatprep.subr.bf16.mxu0 0
        %1510 = vmatpush1.bf16.msra.mxu0 %v1507
        %1511 = vmatprep.subr.bf16.mxu0 0
        %1512 = vmatpush1.bf16.msra.mxu0 0
        %1513 = vmatprep.subr.bf16.mxu0 0
        %1514 = vmatpush1.bf16.msra.mxu0 0
        %1515 = vmatprep.subr.bf16.mxu0 0
        %1516 = vmatpush1.bf16.msra.mxu0 0
        %1517 = vmatprep.subr.bf16.mxu0 0
        %1518 = vmatpush1.bf16.msra.mxu0 0
        %1519 = vmatprep.subr.bf16.mxu0 0
        %1520 = vmatpush1.bf16.msra.mxu0 0
        %1521 = vmatprep.subr.bf16.mxu0 0
        %1522 = vmatpush1.bf16.msra.mxu0 0
        %1523 = vmatprep.subr.bf16.mxu0 0
        %1524 = vmatpush1.bf16.msra.mxu0 0
        %1525 = vmatprep.subr.bf16.mxu0 0
        %1526 = vmatpush1.bf16.msra.mxu0 0
        %1527 = vmatprep.subr.bf16.mxu0 0
        %1528 = vmatpush1.bf16.msra.mxu0 0
        %1529 = vmatprep.subr.bf16.mxu0 0
        %1530 = vmatpush1.bf16.msra.mxu0 0
        %1531 = vmatprep.subr.bf16.mxu0 0
        %1532 = vmatpush1.bf16.msra.mxu0 0
        %1533 = vmatprep.subr.bf16.mxu0 0
        %1534 = vmatpush1.bf16.msra.mxu0 0
        %1535 = vmatprep.subr.bf16.mxu0 0
        %1536 = vmatpush1.bf16.msra.mxu0 0
        %1537 = vmatprep.subr.bf16.mxu0 0
        %1538 = vmatpush1.bf16.msra.mxu0 0
        %1539 = vmatprep.subr.bf16.mxu0 0
        %1540 = vmatpush1.bf16.msra.mxu0 0
        %1541 = vmatprep.mubr.bf16.mxu0 0
        %1542 = vmatmul.mubr.bf16.gmra.mrb[0].mxu0 %v1504
        %v1543 = vpop.f32.mrb[0].mxu0
        %v1544 = vadd.f32 0.0, %v1543
        %v1545 = vpop.f32.mrb[0].mxu0
        %v1546 = vpop.f32.mrb[0].mxu0
        %v1547 = vpop.f32.mrb[0].mxu0
        %1548 = vdwg.mxu0
        %v1549 = vadd.f32 %v1196, %v1544
        %v1550 = vlaneseq
        %v1551 = vshrl.u32 %v1550, 7
        %v1552 = vsub.s32 3, %v1551
        %v1553 = vrot.slane %v1198, %v1552
        %v1554 = vadd.f32 %v1549, %v1553
        %v1555 = vsel %vm510, %v1554, 0.0
        %1556 = vadd.xlane.f32.xlu0 %v1555
        %v1557 = vpop.xlane.xlu0 %1556
        %v1558 = vmul.f32 %v1557, %v710
        %v1559 = vsub.f32 %v1554, %v1558
        %v1560 = vmul.f32 %v1559, %v1559
        %v1561 = vsel %vm510, %v1560, 0.0
        %1562 = vadd.xlane.f32.xlu0 %v1561
        %v1563 = vpop.xlane.xlu0 %1562
        %v1564 = vmul.f32 %v1563, %v710
        %v1565 = vadd.f32 %v1564, 1e-05
        %v1566 = vrsqrt.pop %v1565
        %v1567 = vmul.f32 %v1559, %v1566
        %v1568 = vlaneseq
        %v1569 = vshrl.u32 %v1568, 7
        %v1570 = vsub.s32 4, %v1569
        %v1571 = vrot.slane %v1198, %v1570
        %v1572 = vmul.f32 %v1567, %v1571
        %v1573 = vlaneseq
        %v1574 = vshrl.u32 %v1573, 7
        %v1575 = vsub.s32 5, %v1574
        %v1576 = vrot.slane %v1198, %v1575
        %v1577 = vadd.f32 %v1572, %v1576
        %v1578 = vpack.c.bf16 %v1577, %v1577
        %s1579 = scalar_lea.vmem %s8, 4
        %v1580 = vld [vmem:[%s1579] sm:$0xf]
        %v1581 = vlaneseq
        %v1582 = vshrl.u32 %v1581, 7
        %v1583 = vsub.s32 6, %v1582
        %v1584 = vrot.slane %v1198, %v1583
        %v1586 = vsel %vm510, %v1578, 0
        %v1589 = vsel %vm740, %v1580, 0
        %1591 = vmatprep.subr.bf16.mxu0 0
        %1592 = vmatpush1.bf16.msra.mxu0 %v1589
        %1593 = vmatprep.subr.bf16.mxu0 0
        %1594 = vmatpush1.bf16.msra.mxu0 0
        %1595 = vmatprep.subr.bf16.mxu0 0
        %1596 = vmatpush1.bf16.msra.mxu0 0
        %1597 = vmatprep.subr.bf16.mxu0 0
        %1598 = vmatpush1.bf16.msra.mxu0 0
        %1599 = vmatprep.subr.bf16.mxu0 0
        %1600 = vmatpush1.bf16.msra.mxu0 0
        %1601 = vmatprep.subr.bf16.mxu0 0
        %1602 = vmatpush1.bf16.msra.mxu0 0
        %1603 = vmatprep.subr.bf16.mxu0 0
        %1604 = vmatpush1.bf16.msra.mxu0 0
        %1605 = vmatprep.subr.bf16.mxu0 0
        %1606 = vmatpush1.bf16.msra.mxu0 0
        %1607 = vmatprep.subr.bf16.mxu0 0
        %1608 = vmatpush1.bf16.msra.mxu0 0
        %1609 = vmatprep.subr.bf16.mxu0 0
        %1610 = vmatpush1.bf16.msra.mxu0 0
        %1611 = vmatprep.subr.bf16.mxu0 0
        %1612 = vmatpush1.bf16.msra.mxu0 0
        %1613 = vmatprep.subr.bf16.mxu0 0
        %1614 = vmatpush1.bf16.msra.mxu0 0
        %1615 = vmatprep.subr.bf16.mxu0 0
        %1616 = vmatpush1.bf16.msra.mxu0 0
        %1617 = vmatprep.subr.bf16.mxu0 0
        %1618 = vmatpush1.bf16.msra.mxu0 0
        %1619 = vmatprep.subr.bf16.mxu0 0
        %1620 = vmatpush1.bf16.msra.mxu0 0
        %1621 = vmatprep.subr.bf16.mxu0 0
        %1622 = vmatpush1.bf16.msra.mxu0 0
        %1623 = vmatprep.mubr.bf16.mxu0 0
        %1624 = vmatmul.mubr.bf16.gmra.mrb[0].mxu0 %v1586
        %v1625 = vpop.f32.mrb[0].mxu0
        %v1626 = vadd.f32 %v1584, %v1625
        %v1627 = vpop.f32.mrb[0].mxu0
        %v1628 = vpop.f32.mrb[0].mxu0
        %v1629 = vpop.f32.mrb[0].mxu0
        %1630 = vdwg.mxu0
        %v1631 = vmax.f32 %v1626, 0.0
        %v1632 = vpack.c.bf16 %v1631, %v1631
        %s1633 = scalar_lea.vmem %s9, 8
        %v1634 = vld [vmem:[%s1633] sm:$0xf]
        %v1635 = vld [vmem:[%s1633 + $0x4] sm:$0xf]
        %v1638 = vunpack.c.l.b16 %v1634
        %v1639 = vunpack.c.l.b16 %v1635
        %v1640 = vpack.c.b16 %v1639, %v1638
        %v1643 = vsel %vm662, %v1632, 0
        %1645 = vmatprep.subr.bf16.mxu0 0
        %1646 = vmatpush1.bf16.msra.mxu0 %v1640
        %1647 = vmatprep.subr.bf16.mxu0 0
        %1648 = vmatpush1.bf16.msra.mxu0 0
        %1649 = vmatprep.subr.bf16.mxu0 0
        %1650 = vmatpush1.bf16.msra.mxu0 0
        %1651 = vmatprep.subr.bf16.mxu0 0
        %1652 = vmatpush1.bf16.msra.mxu0 0
        %1653 = vmatprep.subr.bf16.mxu0 0
        %1654 = vmatpush1.bf16.msra.mxu0 0
        %1655 = vmatprep.subr.bf16.mxu0 0
        %1656 = vmatpush1.bf16.msra.mxu0 0
        %1657 = vmatprep.subr.bf16.mxu0 0
        %1658 = vmatpush1.bf16.msra.mxu0 0
        %1659 = vmatprep.subr.bf16.mxu0 0
        %1660 = vmatpush1.bf16.msra.mxu0 0
        %1661 = vmatprep.subr.bf16.mxu0 0
        %1662 = vmatpush1.bf16.msra.mxu0 0
        %1663 = vmatprep.subr.bf16.mxu0 0
        %1664 = vmatpush1.bf16.msra.mxu0 0
        %1665 = vmatprep.subr.bf16.mxu0 0
        %1666 = vmatpush1.bf16.msra.mxu0 0
        %1667 = vmatprep.subr.bf16.mxu0 0
        %1668 = vmatpush1.bf16.msra.mxu0 0
        %1669 = vmatprep.subr.bf16.mxu0 0
        %1670 = vmatpush1.bf16.msra.mxu0 0
        %1671 = vmatprep.subr.bf16.mxu0 0
        %1672 = vmatpush1.bf16.msra.mxu0 0
        %1673 = vmatprep.subr.bf16.mxu0 0
        %1674 = vmatpush1.bf16.msra.mxu0 0
        %1675 = vmatprep.subr.bf16.mxu0 0
        %1676 = vmatpush1.bf16.msra.mxu0 0
        %1677 = vmatprep.mubr.bf16.mxu0 0
        %1678 = vmatmul.mubr.bf16.gmra.mrb[0].mxu0 %v1643
        %v1679 = vpop.f32.mrb[0].mxu0
        %v1680 = vadd.f32 0.0, %v1679
        %v1681 = vpop.f32.mrb[0].mxu0
        %v1682 = vpop.f32.mrb[0].mxu0
        %v1683 = vpop.f32.mrb[0].mxu0
        %1684 = vdwg.mxu0
        %v1685 = vadd.f32 %v1554, %v1680
        %v1686 = vlaneseq
        %v1687 = vshrl.u32 %v1686, 7
        %v1688 = vsub.s32 7, %v1687
        %v1689 = vrot.slane %v1198, %v1688
        %v1690 = vadd.f32 %v1685, %v1689
        %v1691 = vsel %vm510, %v1690, 0.0
        %v1692 = vrot.slane %v1691, 4
        %v1693 = vadd.f32 %v1691, %v1692
        %v1694 = vrot.slane %v1693, 2
        %v1695 = vadd.f32 %v1693, %v1694
        %v1696 = vrot.slane %v1695, 1
        %v1697 = vadd.f32 %v1695, %v1696
        %v1698 = vmul.f32 %v1697, %v710
        %v1699 = vpack.c.bf16 %v1698, %v1698
        %v1700 = vld [vmem:[%s11] sm:$0xf]
        %v1702 = vrot.slane %v412, 2
        %v1705 = vsel %vm510, %v1699, 0
        %v1708 = vsel %vm740, %v1700, 0
        %1710 = vmatprep.subr.bf16.mxu0 0
        %1711 = vmatpush1.bf16.msra.mxu0 %v1708
        %1712 = vmatprep.subr.bf16.mxu0 0
        %1713 = vmatpush1.bf16.msra.mxu0 0
        %1714 = vmatprep.subr.bf16.mxu0 0
        %1715 = vmatpush1.bf16.msra.mxu0 0
        %1716 = vmatprep.subr.bf16.mxu0 0
        %1717 = vmatpush1.bf16.msra.mxu0 0
        %1718 = vmatprep.subr.bf16.mxu0 0
        %1719 = vmatpush1.bf16.msra.mxu0 0
        %1720 = vmatprep.subr.bf16.mxu0 0
        %1721 = vmatpush1.bf16.msra.mxu0 0
        %1722 = vmatprep.subr.bf16.mxu0 0
        %1723 = vmatpush1.bf16.msra.mxu0 0
        %1724 = vmatprep.subr.bf16.mxu0 0
        %1725 = vmatpush1.bf16.msra.mxu0 0
        %1726 = vmatprep.subr.bf16.mxu0 0
        %1727 = vmatpush1.bf16.msra.mxu0 0
        %1728 = vmatprep.subr.bf16.mxu0 0
        %1729 = vmatpush1.bf16.msra.mxu0 0
        %1730 = vmatprep.subr.bf16.mxu0 0
        %1731 = vmatpush1.bf16.msra.mxu0 0
        %1732 = vmatprep.subr.bf16.mxu0 0
        %1733 = vmatpush1.bf16.msra.mxu0 0
        %1734 = vmatprep.subr.bf16.mxu0 0
        %1735 = vmatpush1.bf16.msra.mxu0 0
        %1736 = vmatprep.subr.bf16.mxu0 0
        %1737 = vmatpush1.bf16.msra.mxu0 0
        %1738 = vmatprep.subr.bf16.mxu0 0
        %1739 = vmatpush1.bf16.msra.mxu0 0
        %1740 = vmatprep.subr.bf16.mxu0 0
        %1741 = vmatpush1.bf16.msra.mxu0 0
        %1742 = vmatprep.mubr.bf16.mxu0 0
        %1743 = vmatmul.mubr.bf16.gmra.mrb[0].mxu0 %v1705
        %v1744 = vpop.f32.mrb[0].mxu0
        %v1745 = vadd.f32 %v1702, %v1744
        %v1746 = vpop.f32.mrb[0].mxu0
        %v1747 = vpop.f32.mrb[0].mxu0
        %v1748 = vpop.f32.mrb[0].mxu0
        %1749 = vdwg.mxu0
        %1750 = vst [vmem:[%s405] sm:$0x1] %v1745
        %s1751 = sand.u32 %s291, 1
        %s1752 = scalar_lea.sflag [#allocation3], %s1751
        %s1753 = sand.u32 %s291, 1
        %s1754 = scalar_lea.vmem [#allocation2], %s1753
        // Predicated region
        $region69: #{tpu_custom_call.1} parent=67 // pred_check
          %p1755 = pneg %p301
        $region70: #{tpu_custom_call.1} parent=67 // pred_check_branch
          %1757 = sbr.rel (%p1755) target = $region72
        $region71: #{tpu_custom_call.1} parent=67 // pred_region
          %s1759 = ssub.s32 16, 16
          %1760 = vsyncadd %s1752, %s1759
          %s1761 = smul.addr %s26, 16
          %s1762 = scalar_lea.hbm %s12, %s1761
          %s1764 = sshll.u32 %s1754, 4
          %s1765 = int_to_ptr.vmem [resolvable:$true] %s1764
          %1767 = dma.vmem_to_hbm [thread:$0]  %s1765, 16, %s1762, %s1752
        $region72: #{tpu_custom_call.1} parent=67 // pred_fallthru
          _
      $region68: #{tpu_custom_call.1} parent=5 // pred_fallthru
        _
      %p1768 = scmp.le.s32.totalorder 2, %s21
      // Predicated region
      $region73: #{tpu_custom_call.1} parent=5 // pred_check
        %p1769 = pneg %p1768
      $region74: #{tpu_custom_call.1} parent=5 // pred_check_branch
        %1771 = sbr.rel (%p1769) target = $region76
      $region75: #{tpu_custom_call.1} parent=5 // pred_region
        %s1772 = ssub.s32 %s21, 2
        // Predicated region
        $region77: #{tpu_custom_call.1} parent=75 // pred_check
          %p1773 = pneg %p307
        $region78: #{tpu_custom_call.1} parent=75 // pred_check_branch
          %1775 = sbr.rel (%p1773) target = $region80
        $region79: #{tpu_custom_call.1} parent=75 // pred_region
          %s1776 = sand.u32 %s292, 1
          %s1777 = scalar_lea.sflag [#allocation3], %s1776
          %s1778 = sand.u32 %s292, 1
          %s1779 = scalar_lea.vmem [#allocation2], %s1778
          %1780 = dma.done %s1777, 16
        $region80: #{tpu_custom_call.1} parent=75 // pred_fallthru
          _
      $region76: #{tpu_custom_call.1} parent=5 // pred_fallthru
        _
    $region6: #{tpu_custom_call.1} parent=1 // loop_footer
      %s25 = sadd.s32 1, %s21
    $region7: #{tpu_custom_call.1} parent=1 // loop_footer_branch
      %20 = sbr.rel target = $region3
    $region8: #{tpu_custom_call.1} parent=1 // loop_exit
      _
    %1781 = vsyncpa [#allocation3], 1
    %s1782 = scalar_lea.sflag [#allocation3], 1
    %1783 = vsyncpa %s1782, 1

</llo_original>
